<compile_context>
chip_gen: v7x
topology: tpu7x:2x2x1
jax: 0.10.0
libtpu: 0.0.40
codegen_flags: <defaults>
</compile_context>

<pallas_src>
import math
from functools import partial

import jax
import jax.numpy as jnp
from jax import lax
from jax.experimental import pallas as pl
from jax.experimental.pallas import tpu as pltpu

LANE = 128      # vreg lane width: each gate block / head output padded to a multiple of this
SUBLANE = 8     # f32 sublane count: batch padded to a multiple of this


def _round_up(n, m):
    return ((n + m - 1) // m) * m


def stock_lstm_kernel(x_ref, wih_ref, whh_ref, b_ref, wlin_ref, blin_ref, o_ref, gx_ref,
                      *, rec_dtype):
    """Single-layer LSTM recurrence over time + final-hidden linear head.

    x_ref    : (T*Bp, I)     time-major input, batch padded to Bp (multiple of 8 sublanes)
    wih_ref  : (I, 4*Hp)     input->gates weight (transposed, gate-padded to 128 lanes)
    whh_ref  : (Hp, 4*Hp)    hidden->gates weight (transposed, gate-padded)
    b_ref    : (1, 4*Hp)     combined bias b_ih + b_hh (gate-padded)
    wlin_ref : (Hp, Op)      linear head weight (transposed, row/col zero-padded)
    blin_ref : (1, Op)       linear head bias (col zero-padded)
    o_ref    : (Bp, Op)      output = linear(h_T), lane-dense padded
    gx_ref   : (T*Bp, 4*Hp)  VMEM scratch: precomputed input projection + bias
    """
    Bp, Op = o_ref.shape
    Hp = whh_ref.shape[0]          # padded hidden size (multiple of 128)
    T = x_ref.shape[0] // Bp

    # ---- Phase 1 (off the serial path): input projection for ALL timesteps as one
    #      (T*Bp, I) @ (I, 4Hp) MXU matmul with the combined bias folded in once.
    #      2-D layout throughout -> no in-kernel reshape, no relayout copies. ----
    gx_ref[...] = (
        jnp.dot(x_ref[...], wih_ref[...], preferred_element_type=jnp.float32) + b_ref[...]
    )

    # Hoist the W_hh load (and optional bf16 cast for v6e/v7x MXUs) out of the loop.
    whh = whh_ref[...].astype(rec_dtype)

    # ---- Phase 2: serial recurrence. Per step: one (Bp,Hp)x(Hp,4Hp) matmul plus
    #      whole-vreg (128-lane-aligned) gate activations / elementwise. ----
    def step(t, carry):
        h, c = carry
        row = pl.multiple_of(t * Bp, SUBLANE)          # aligned sublane-block start
        gates = gx_ref[pl.ds(row, Bp), :] + jnp.dot(
            h.astype(rec_dtype), whh, preferred_element_type=jnp.float32)   # (Bp, 4Hp)
        # Hp % 128 == 0, so each gate slice below is a full, aligned 128-lane block.
        i_g = jax.nn.sigmoid(gates[:, 0 * Hp:1 * Hp])
        f_g = jax.nn.sigmoid(gates[:, 1 * Hp:2 * Hp])
        g_g = jnp.tanh(gates[:, 2 * Hp:3 * Hp])
        o_g = jax.nn.sigmoid(gates[:, 3 * Hp:4 * Hp])
        c_new = f_g * c + i_g * g_g
        h_new = o_g * jnp.tanh(c_new)
        # Padded hidden lanes: pre-activations are exactly 0 -> i/f/o = 0.5, g = tanh(0) = 0;
        # with c0 = 0 the padded c (and hence h) stays exactly 0 every step.  This relies on
        # the zero initial cell state (and the zero W_lin rows make it harmless regardless).
        return (h_new, c_new)

    h0 = jnp.zeros((Bp, Hp), jnp.float32)
    c0 = jnp.zeros((Bp, Hp), jnp.float32)
    # Full unroll for small static T (LLO schedules across steps); bounded unroll beyond
    # that as a vreg-pressure guard.
    h_final, _ = lax.fori_loop(0, T, step, (h0, c0), unroll=(True if T <= 16 else 4))

    # drop1 (identity in eval) -> linear head -> drop2 (identity in eval).
    # O padded to 128 lanes: full MXU tile + unmasked lane-dense output store.
    out = jnp.dot(h_final, wlin_ref[...], preferred_element_type=jnp.float32) + blin_ref[...]
    o_ref[...] = out.astype(o_ref.dtype)


def prepare_params(params):
    """One-time weight prep: transposes + gate/lane zero-padding.

    Call once and cache the result (build_forward does this); do NOT rebuild per call —
    at tiny shapes the per-call padding graph would dominate the kernel itself.
    """
    H = params["w_hh"].shape[1]          # w_hh: (4H, H)
    O = params["w_lin"].shape[0]         # w_lin: (O, H)
    Hp = _round_up(H, LANE)
    Op = _round_up(O, LANE)

    # PyTorch stores LSTM weights as (4H, in); transpose so gates = x @ W^T.
    wih_t = jnp.transpose(params["w_ih"]).astype(jnp.float32)        # (I, 4H)
    whh_t = jnp.transpose(params["w_hh"]).astype(jnp.float32)        # (H, 4H)
    bias = (params["b_ih"] + params["b_hh"]).astype(jnp.float32)     # (4H,)
    wlin_t = jnp.transpose(params["w_lin"]).astype(jnp.float32)      # (H, O)
    blin = params["b_lin"].astype(jnp.float32)                       # (O,)

    def pad_gate_cols(w):  # (rows, 4H) -> (rows, 4Hp): each gate block zero-padded to Hp
        rows = w.shape[0]
        out = jnp.zeros((rows, 4 * Hp), jnp.float32)
        for k in range(4):
            out = out.at[:, k * Hp:k * Hp + H].set(w[:, k * H:(k + 1) * H])
        return out

    wih_p = pad_gate_cols(wih_t)                                                       # (I, 4Hp)
    whh_p = jnp.zeros((Hp, 4 * Hp), jnp.float32).at[:H, :].set(pad_gate_cols(whh_t))   # (Hp, 4Hp)
    b_p = pad_gate_cols(bias.reshape(1, -1))                                           # (1, 4Hp)
    wlin_p = jnp.zeros((Hp, Op), jnp.float32).at[:H, :O].set(wlin_t)                   # (Hp, Op)
    blin_p = jnp.zeros((1, Op), jnp.float32).at[0, :O].set(blin)                       # (1, Op)

    arrays = dict(wih_p=wih_p, whh_p=whh_p, b_p=b_p, wlin_p=wlin_p, blin_p=blin_p)
    dims = dict(H=H, O=O, Hp=Hp, Op=Op)
    return arrays, dims


def build_forward(params, rec_dtype=jnp.float32):
    """Returns a jitted forward(x_bti: (B,T,I)) -> (B, O).

    Weight padding is done exactly once here.  rec_dtype=jnp.bfloat16 shortens the
    per-step h @ W_hh MXU latency on v6e/v7x; default f32 keeps bit-level agreement with
    the f32 reference (the recurrence is latency-bound at these shapes either way).
    """
    arrays, dims = prepare_params(params)
    O, Op, Hp = dims["O"], dims["Op"], dims["Hp"]
    kernel = partial(stock_lstm_kernel, rec_dtype=rec_dtype)

    @jax.jit
    def forward(x_bti):
        B, T, I = x_bti.shape
        Bp = _round_up(B, SUBLANE)
        # time-major, batch padded to Bp sublanes, flattened 2-D (T*Bp, I)
        x_tbi = jnp.transpose(x_bti, (1, 0, 2)).astype(jnp.float32)            # (T, B, I)
        x_flat = jnp.zeros((T, Bp, I), jnp.float32).at[:, :B, :].set(x_tbi).reshape(T * Bp, I)

        vmem = pl.BlockSpec(memory_space=pltpu.MemorySpace.VMEM)
        out_p = pl.pallas_call(
            kernel,
            out_shape=jax.ShapeDtypeStruct((Bp, Op), jnp.float32),
            in_specs=[vmem] * 6,
            out_specs=vmem,
            scratch_shapes=[pltpu.VMEM((T * Bp, 4 * Hp), jnp.float32)],
        )(x_flat, arrays["wih_p"], arrays["whh_p"], arrays["b_p"],
          arrays["wlin_p"], arrays["blin_p"])
        return out_p[:B, :O]

    return forward


def init_params(key, input_size, hidden, output):
    """Mirror the PyTorch __init__: xavier_normal_(gain=0.001) LSTM weights,
    zero LSTM biases, default (uniform) Linear init."""
    k1, k2, k3, k4 = jax.random.split(key, 4)
    gain = 0.001

    def xavier_normal(k, shape):
        fan_out, fan_in = shape
        std = gain * math.sqrt(2.0 / (fan_in + fan_out))
        return std * jax.random.normal(k, shape, dtype=jnp.float32)

    w_ih = xavier_normal(k1, (4 * hidden, input_size))
    w_hh = xavier_normal(k2, (4 * hidden, hidden))
    b_ih = jnp.zeros((4 * hidden,), jnp.float32)
    b_hh = jnp.zeros((4 * hidden,), jnp.float32)

    bound = 1.0 / math.sqrt(hidden)
    w_lin = jax.random.uniform(k3, (output, hidden), jnp.float32, -bound, bound)
    b_lin = jax.random.uniform(k4, (output,), jnp.float32, -bound, bound)

    return {"w_ih": w_ih, "w_hh": w_hh, "b_ih": b_ih, "b_hh": b_hh,
            "w_lin": w_lin, "b_lin": b_lin}


def reference_forward(x_bti, params):
    """Pure-JAX reference of the PyTorch forward (eval mode)."""
    B, T, I = x_bti.shape
    H = params["w_hh"].shape[1]
    wih_t = params["w_ih"].T
    whh_t = params["w_hh"].T
    bias = params["b_ih"] + params["b_hh"]
    h = jnp.zeros((B, H), jnp.float32)
    c = jnp.zeros((B, H), jnp.float32)
    for t in range(T):
        gates = x_bti[:, t, :] @ wih_t + h @ whh_t + bias
        i_g = jax.nn.sigmoid(gates[:, 0 * H:1 * H])
        f_g = jax.nn.sigmoid(gates[:, 1 * H:2 * H])
        g_g = jnp.tanh(gates[:, 2 * H:3 * H])
        o_g = jax.nn.sigmoid(gates[:, 3 * H:4 * H])
        c = f_g * c + i_g * g_g
        h = o_g * jnp.tanh(c)
    return h @ params["w_lin"].T + params["b_lin"]


if __name__ == "__main__":
    B, T, I, H, O = 2, 8, 4, 32, 1

    key = jax.random.PRNGKey(0)
    k_param, k_x = jax.random.split(key)
    params = init_params(k_param, I, H, O)
    x = jax.random.normal(k_x, (B, T, I), dtype=jnp.float32)

    forward = build_forward(params)            # weight prep hoisted + cached here (once)
    out = jax.block_until_ready(forward(x))

    ref = reference_forward(x, params)
    assert out.shape == (B, O)
    assert jnp.allclose(out, ref, atol=1e-5, rtol=1e-5)

    print("KERNEL_OK")
</pallas_src>

<mosaic_0001>
module attributes {stable_mosaic.version = 11 : i64} {
  func.func @stock_lstm_kernel(%arg0: memref<64x4xf32, #tpu.memory_space<vmem>>, %arg1: memref<4x512xf32, #tpu.memory_space<vmem>>, %arg2: memref<128x512xf32, #tpu.memory_space<vmem>>, %arg3: memref<1x512xf32, #tpu.memory_space<vmem>>, %arg4: memref<128x128xf32, #tpu.memory_space<vmem>>, %arg5: memref<1x128xf32, #tpu.memory_space<vmem>>, %arg6: memref<8x128xf32, #tpu.memory_space<vmem>>, %arg7: memref<64x512xf32, #tpu.memory_space<vmem>>) attributes {dimension_semantics = [], scalar_prefetch = 0 : i64, scratch_operands = 1 : i64, tpu.core_type = #tpu.core_type<tc>} {
    %c0 = arith.constant 0 : index
    %c0_0 = arith.constant 0 : index
    %0 = vector.load %arg0[%c0, %c0_0] : memref<64x4xf32, #tpu.memory_space<vmem>>, vector<64x4xf32>
    %c0_1 = arith.constant 0 : index
    %c0_2 = arith.constant 0 : index
    %1 = vector.load %arg1[%c0_1, %c0_2] : memref<4x512xf32, #tpu.memory_space<vmem>>, vector<4x512xf32>
    %cst = arith.constant dense<0.000000e+00> : vector<64x512xf32>
    %2 = tpu.matmul %0, %1, %cst {dimension_numbers = #tpu.dot_dimension_numbers<[1], [0], [0], [1], [0, 0, 1, 1], [], []>} : vector<64x4xf32>, vector<4x512xf32>, vector<64x512xf32> -> vector<64x512xf32>
    %c0_3 = arith.constant 0 : index
    %c0_4 = arith.constant 0 : index
    %3 = vector.load %arg3[%c0_3, %c0_4] : memref<1x512xf32, #tpu.memory_space<vmem>>, vector<1x512xf32>
    %4 = vector.broadcast %3 : vector<1x512xf32> to vector<64x512xf32>
    %5 = arith.addf %2, %4 : vector<64x512xf32>
    %c0_5 = arith.constant 0 : index
    %c0_6 = arith.constant 0 : index
    %6 = vector.load %arg7[%c0_5, %c0_6] : memref<64x512xf32, #tpu.memory_space<vmem>>, vector<64x512xf32>
    tpu.vector_store %arg7[%c0_5, %c0_6], %5 {strides = array<i32>} : memref<64x512xf32, #tpu.memory_space<vmem>>, vector<64x512xf32>,
    %c0_7 = arith.constant 0 : index
    %c0_8 = arith.constant 0 : index
    %7 = vector.load %arg2[%c0_7, %c0_8] : memref<128x512xf32, #tpu.memory_space<vmem>>, vector<128x512xf32>
    %cst_9 = arith.constant 0.000000e+00 : f32
    %8 = vector.broadcast %cst_9 : f32 to vector<8x128xf32>
    %cst_10 = arith.constant 0.000000e+00 : f32
    %9 = vector.broadcast %cst_10 : f32 to vector<8x128xf32>
    %c0_i32 = arith.constant 0 : i32
    %c8_i32 = arith.constant 8 : i32
    %10 = arith.muli %c0_i32, %c8_i32 : i32
    %11 = tpu.assume_multiple %10, 8 : i32
    %12 = arith.index_cast %11 : i32 to index
    %c0_11 = arith.constant 0 : index
    %13 = vector.load %arg7[%12, %c0_11] : memref<64x512xf32, #tpu.memory_space<vmem>>, vector<8x512xf32>
    %cst_12 = arith.constant dense<0.000000e+00> : vector<8x512xf32>
    %14 = tpu.matmul %8, %7, %cst_12 {dimension_numbers = #tpu.dot_dimension_numbers<[1], [0], [0], [1], [0, 0, 1, 1], [], []>} : vector<8x128xf32>, vector<128x512xf32>, vector<8x512xf32> -> vector<8x512xf32>
    %15 = arith.addf %13, %14 : vector<8x512xf32>
    %16 = vector.extract_strided_slice %15 {offsets = [0, 0], sizes = [8, 128], strides = [1, 1]} : vector<8x512xf32> to vector<8x128xf32>
    %17 = arith.negf %16 : vector<8x128xf32>
    %18 = math.exp %17 : vector<8x128xf32>
    %cst_13 = arith.constant 1.000000e+00 : f32
    %19 = vector.broadcast %cst_13 : f32 to vector<8x128xf32>
    %20 = arith.addf %19, %18 : vector<8x128xf32>
    %21 = arith.divf %19, %20 : vector<8x128xf32>
    %22 = vector.extract_strided_slice %15 {offsets = [0, 128], sizes = [8, 128], strides = [1, 1]} : vector<8x512xf32> to vector<8x128xf32>
    %23 = arith.negf %22 : vector<8x128xf32>
    %24 = math.exp %23 : vector<8x128xf32>
    %cst_14 = arith.constant 1.000000e+00 : f32
    %25 = vector.broadcast %cst_14 : f32 to vector<8x128xf32>
    %26 = arith.addf %25, %24 : vector<8x128xf32>
    %27 = arith.divf %25, %26 : vector<8x128xf32>
    %28 = vector.extract_strided_slice %15 {offsets = [0, 256], sizes = [8, 128], strides = [1, 1]} : vector<8x512xf32> to vector<8x128xf32>
    %29 = math.tanh %28 : vector<8x128xf32>
    %30 = vector.extract_strided_slice %15 {offsets = [0, 384], sizes = [8, 128], strides = [1, 1]} : vector<8x512xf32> to vector<8x128xf32>
    %31 = arith.negf %30 : vector<8x128xf32>
    %32 = math.exp %31 : vector<8x128xf32>
    %cst_15 = arith.constant 1.000000e+00 : f32
    %33 = vector.broadcast %cst_15 : f32 to vector<8x128xf32>
    %34 = arith.addf %33, %32 : vector<8x128xf32>
    %35 = arith.divf %33, %34 : vector<8x128xf32>
    %36 = arith.mulf %27, %9 : vector<8x128xf32>
    %37 = arith.mulf %21, %29 : vector<8x128xf32>
    %38 = arith.addf %36, %37 : vector<8x128xf32>
    %39 = math.tanh %38 : vector<8x128xf32>
    %40 = arith.mulf %35, %39 : vector<8x128xf32>
    %c1_i32 = arith.constant 1 : i32
    %c8_i32_16 = arith.constant 8 : i32
    %41 = arith.muli %c1_i32, %c8_i32_16 : i32
    %42 = tpu.assume_multiple %41, 8 : i32
    %43 = arith.index_cast %42 : i32 to index
    %c0_17 = arith.constant 0 : index
    %44 = vector.load %arg7[%43, %c0_17] : memref<64x512xf32, #tpu.memory_space<vmem>>, vector<8x512xf32>
    %cst_18 = arith.constant dense<0.000000e+00> : vector<8x512xf32>
    %45 = tpu.matmul %40, %7, %cst_18 {dimension_numbers = #tpu.dot_dimension_numbers<[1], [0], [0], [1], [0, 0, 1, 1], [], []>} : vector<8x128xf32>, vector<128x512xf32>, vector<8x512xf32> -> vector<8x512xf32>
    %46 = arith.addf %44, %45 : vector<8x512xf32>
    %47 = vector.extract_strided_slice %46 {offsets = [0, 0], sizes = [8, 128], strides = [1, 1]} : vector<8x512xf32> to vector<8x128xf32>
    %48 = arith.negf %47 : vector<8x128xf32>
    %49 = math.exp %48 : vector<8x128xf32>
    %cst_19 = arith.constant 1.000000e+00 : f32
    %50 = vector.broadcast %cst_19 : f32 to vector<8x128xf32>
    %51 = arith.addf %50, %49 : vector<8x128xf32>
    %52 = arith.divf %50, %51 : vector<8x128xf32>
    %53 = vector.extract_strided_slice %46 {offsets = [0, 128], sizes = [8, 128], strides = [1, 1]} : vector<8x512xf32> to vector<8x128xf32>
    %54 = arith.negf %53 : vector<8x128xf32>
    %55 = math.exp %54 : vector<8x128xf32>
    %cst_20 = arith.constant 1.000000e+00 : f32
    %56 = vector.broadcast %cst_20 : f32 to vector<8x128xf32>
    %57 = arith.addf %56, %55 : vector<8x128xf32>
    %58 = arith.divf %56, %57 : vector<8x128xf32>
    %59 = vector.extract_strided_slice %46 {offsets = [0, 256], sizes = [8, 128], strides = [1, 1]} : vector<8x512xf32> to vector<8x128xf32>
    %60 = math.tanh %59 : vector<8x128xf32>
    %61 = vector.extract_strided_slice %46 {offsets = [0, 384], sizes = [8, 128], strides = [1, 1]} : vector<8x512xf32> to vector<8x128xf32>
    %62 = arith.negf %61 : vector<8x128xf32>
    %63 = math.exp %62 : vector<8x128xf32>
    %cst_21 = arith.constant 1.000000e+00 : f32
    %64 = vector.broadcast %cst_21 : f32 to vector<8x128xf32>
    %65 = arith.addf %64, %63 : vector<8x128xf32>
    %66 = arith.divf %64, %65 : vector<8x128xf32>
    %67 = arith.mulf %58, %38 : vector<8x128xf32>
    %68 = arith.mulf %52, %60 : vector<8x128xf32>
    %69 = arith.addf %67, %68 : vector<8x128xf32>
    %70 = math.tanh %69 : vector<8x128xf32>
    %71 = arith.mulf %66, %70 : vector<8x128xf32>
    %c2_i32 = arith.constant 2 : i32
    %c8_i32_22 = arith.constant 8 : i32
    %72 = arith.muli %c2_i32, %c8_i32_22 : i32
    %73 = tpu.assume_multiple %72, 8 : i32
    %74 = arith.index_cast %73 : i32 to index
    %c0_23 = arith.constant 0 : index
    %75 = vector.load %arg7[%74, %c0_23] : memref<64x512xf32, #tpu.memory_space<vmem>>, vector<8x512xf32>
    %cst_24 = arith.constant dense<0.000000e+00> : vector<8x512xf32>
    %76 = tpu.matmul %71, %7, %cst_24 {dimension_numbers = #tpu.dot_dimension_numbers<[1], [0], [0], [1], [0, 0, 1, 1], [], []>} : vector<8x128xf32>, vector<128x512xf32>, vector<8x512xf32> -> vector<8x512xf32>
    %77 = arith.addf %75, %76 : vector<8x512xf32>
    %78 = vector.extract_strided_slice %77 {offsets = [0, 0], sizes = [8, 128], strides = [1, 1]} : vector<8x512xf32> to vector<8x128xf32>
    %79 = arith.negf %78 : vector<8x128xf32>
    %80 = math.exp %79 : vector<8x128xf32>
    %cst_25 = arith.constant 1.000000e+00 : f32
    %81 = vector.broadcast %cst_25 : f32 to vector<8x128xf32>
    %82 = arith.addf %81, %80 : vector<8x128xf32>
    %83 = arith.divf %81, %82 : vector<8x128xf32>
    %84 = vector.extract_strided_slice %77 {offsets = [0, 128], sizes = [8, 128], strides = [1, 1]} : vector<8x512xf32> to vector<8x128xf32>
    %85 = arith.negf %84 : vector<8x128xf32>
    %86 = math.exp %85 : vector<8x128xf32>
    %cst_26 = arith.constant 1.000000e+00 : f32
    %87 = vector.broadcast %cst_26 : f32 to vector<8x128xf32>
    %88 = arith.addf %87, %86 : vector<8x128xf32>
    %89 = arith.divf %87, %88 : vector<8x128xf32>
    %90 = vector.extract_strided_slice %77 {offsets = [0, 256], sizes = [8, 128], strides = [1, 1]} : vector<8x512xf32> to vector<8x128xf32>
    %91 = math.tanh %90 : vector<8x128xf32>
    %92 = vector.extract_strided_slice %77 {offsets = [0, 384], sizes = [8, 128], strides = [1, 1]} : vector<8x512xf32> to vector<8x128xf32>
    %93 = arith.negf %92 : vector<8x128xf32>
    %94 = math.exp %93 : vector<8x128xf32>
    %cst_27 = arith.constant 1.000000e+00 : f32
    %95 = vector.broadcast %cst_27 : f32 to vector<8x128xf32>
    %96 = arith.addf %95, %94 : vector<8x128xf32>
    %97 = arith.divf %95, %96 : vector<8x128xf32>
    %98 = arith.mulf %89, %69 : vector<8x128xf32>
    %99 = arith.mulf %83, %91 : vector<8x128xf32>
    %100 = arith.addf %98, %99 : vector<8x128xf32>
    %101 = math.tanh %100 : vector<8x128xf32>
    %102 = arith.mulf %97, %101 : vector<8x128xf32>
    %c3_i32 = arith.constant 3 : i32
    %c8_i32_28 = arith.constant 8 : i32
    %103 = arith.muli %c3_i32, %c8_i32_28 : i32
    %104 = tpu.assume_multiple %103, 8 : i32
    %105 = arith.index_cast %104 : i32 to index
    %c0_29 = arith.constant 0 : index
    %106 = vector.load %arg7[%105, %c0_29] : memref<64x512xf32, #tpu.memory_space<vmem>>, vector<8x512xf32>
    %cst_30 = arith.constant dense<0.000000e+00> : vector<8x512xf32>
    %107 = tpu.matmul %102, %7, %cst_30 {dimension_numbers = #tpu.dot_dimension_numbers<[1], [0], [0], [1], [0, 0, 1, 1], [], []>} : vector<8x128xf32>, vector<128x512xf32>, vector<8x512xf32> -> vector<8x512xf32>
    %108 = arith.addf %106, %107 : vector<8x512xf32>
    %109 = vector.extract_strided_slice %108 {offsets = [0, 0], sizes = [8, 128], strides = [1, 1]} : vector<8x512xf32> to vector<8x128xf32>
    %110 = arith.negf %109 : vector<8x128xf32>
    %111 = math.exp %110 : vector<8x128xf32>
    %cst_31 = arith.constant 1.000000e+00 : f32
    %112 = vector.broadcast %cst_31 : f32 to vector<8x128xf32>
    %113 = arith.addf %112, %111 : vector<8x128xf32>
    %114 = arith.divf %112, %113 : vector<8x128xf32>
    %115 = vector.extract_strided_slice %108 {offsets = [0, 128], sizes = [8, 128], strides = [1, 1]} : vector<8x512xf32> to vector<8x128xf32>
    %116 = arith.negf %115 : vector<8x128xf32>
    %117 = math.exp %116 : vector<8x128xf32>
    %cst_32 = arith.constant 1.000000e+00 : f32
    %118 = vector.broadcast %cst_32 : f32 to vector<8x128xf32>
    %119 = arith.addf %118, %117 : vector<8x128xf32>
    %120 = arith.divf %118, %119 : vector<8x128xf32>
    %121 = vector.extract_strided_slice %108 {offsets = [0, 256], sizes = [8, 128], strides = [1, 1]} : vector<8x512xf32> to vector<8x128xf32>
    %122 = math.tanh %121 : vector<8x128xf32>
    %123 = vector.extract_strided_slice %108 {offsets = [0, 384], sizes = [8, 128], strides = [1, 1]} : vector<8x512xf32> to vector<8x128xf32>
    %124 = arith.negf %123 : vector<8x128xf32>
    %125 = math.exp %124 : vector<8x128xf32>
    %cst_33 = arith.constant 1.000000e+00 : f32
    %126 = vector.broadcast %cst_33 : f32 to vector<8x128xf32>
    %127 = arith.addf %126, %125 : vector<8x128xf32>
    %128 = arith.divf %126, %127 : vector<8x128xf32>
    %129 = arith.mulf %120, %100 : vector<8x128xf32>
    %130 = arith.mulf %114, %122 : vector<8x128xf32>
    %131 = arith.addf %129, %130 : vector<8x128xf32>
    %132 = math.tanh %131 : vector<8x128xf32>
    %133 = arith.mulf %128, %132 : vector<8x128xf32>
    %c4_i32 = arith.constant 4 : i32
    %c8_i32_34 = arith.constant 8 : i32
    %134 = arith.muli %c4_i32, %c8_i32_34 : i32
    %135 = tpu.assume_multiple %134, 8 : i32
    %136 = arith.index_cast %135 : i32 to index
    %c0_35 = arith.constant 0 : index
    %137 = vector.load %arg7[%136, %c0_35] : memref<64x512xf32, #tpu.memory_space<vmem>>, vector<8x512xf32>
    %cst_36 = arith.constant dense<0.000000e+00> : vector<8x512xf32>
    %138 = tpu.matmul %133, %7, %cst_36 {dimension_numbers = #tpu.dot_dimension_numbers<[1], [0], [0], [1], [0, 0, 1, 1], [], []>} : vector<8x128xf32>, vector<128x512xf32>, vector<8x512xf32> -> vector<8x512xf32>
    %139 = arith.addf %137, %138 : vector<8x512xf32>
    %140 = vector.extract_strided_slice %139 {offsets = [0, 0], sizes = [8, 128], strides = [1, 1]} : vector<8x512xf32> to vector<8x128xf32>
    %141 = arith.negf %140 : vector<8x128xf32>
    %142 = math.exp %141 : vector<8x128xf32>
    %cst_37 = arith.constant 1.000000e+00 : f32
    %143 = vector.broadcast %cst_37 : f32 to vector<8x128xf32>
    %144 = arith.addf %143, %142 : vector<8x128xf32>
    %145 = arith.divf %143, %144 : vector<8x128xf32>
    %146 = vector.extract_strided_slice %139 {offsets = [0, 128], sizes = [8, 128], strides = [1, 1]} : vector<8x512xf32> to vector<8x128xf32>
    %147 = arith.negf %146 : vector<8x128xf32>
    %148 = math.exp %147 : vector<8x128xf32>
    %cst_38 = arith.constant 1.000000e+00 : f32
    %149 = vector.broadcast %cst_38 : f32 to vector<8x128xf32>
    %150 = arith.addf %149, %148 : vector<8x128xf32>
    %151 = arith.divf %149, %150 : vector<8x128xf32>
    %152 = vector.extract_strided_slice %139 {offsets = [0, 256], sizes = [8, 128], strides = [1, 1]} : vector<8x512xf32> to vector<8x128xf32>
    %153 = math.tanh %152 : vector<8x128xf32>
    %154 = vector.extract_strided_slice %139 {offsets = [0, 384], sizes = [8, 128], strides = [1, 1]} : vector<8x512xf32> to vector<8x128xf32>
    %155 = arith.negf %154 : vector<8x128xf32>
    %156 = math.exp %155 : vector<8x128xf32>
    %cst_39 = arith.constant 1.000000e+00 : f32
    %157 = vector.broadcast %cst_39 : f32 to vector<8x128xf32>
    %158 = arith.addf %157, %156 : vector<8x128xf32>
    %159 = arith.divf %157, %158 : vector<8x128xf32>
    %160 = arith.mulf %151, %131 : vector<8x128xf32>
    %161 = arith.mulf %145, %153 : vector<8x128xf32>
    %162 = arith.addf %160, %161 : vector<8x128xf32>
    %163 = math.tanh %162 : vector<8x128xf32>
    %164 = arith.mulf %159, %163 : vector<8x128xf32>
    %c5_i32 = arith.constant 5 : i32
    %c8_i32_40 = arith.constant 8 : i32
    %165 = arith.muli %c5_i32, %c8_i32_40 : i32
    %166 = tpu.assume_multiple %165, 8 : i32
    %167 = arith.index_cast %166 : i32 to index
    %c0_41 = arith.constant 0 : index
    %168 = vector.load %arg7[%167, %c0_41] : memref<64x512xf32, #tpu.memory_space<vmem>>, vector<8x512xf32>
    %cst_42 = arith.constant dense<0.000000e+00> : vector<8x512xf32>
    %169 = tpu.matmul %164, %7, %cst_42 {dimension_numbers = #tpu.dot_dimension_numbers<[1], [0], [0], [1], [0, 0, 1, 1], [], []>} : vector<8x128xf32>, vector<128x512xf32>, vector<8x512xf32> -> vector<8x512xf32>
    %170 = arith.addf %168, %169 : vector<8x512xf32>
    %171 = vector.extract_strided_slice %170 {offsets = [0, 0], sizes = [8, 128], strides = [1, 1]} : vector<8x512xf32> to vector<8x128xf32>
    %172 = arith.negf %171 : vector<8x128xf32>
    %173 = math.exp %172 : vector<8x128xf32>
    %cst_43 = arith.constant 1.000000e+00 : f32
    %174 = vector.broadcast %cst_43 : f32 to vector<8x128xf32>
    %175 = arith.addf %174, %173 : vector<8x128xf32>
    %176 = arith.divf %174, %175 : vector<8x128xf32>
    %177 = vector.extract_strided_slice %170 {offsets = [0, 128], sizes = [8, 128], strides = [1, 1]} : vector<8x512xf32> to vector<8x128xf32>
    %178 = arith.negf %177 : vector<8x128xf32>
    %179 = math.exp %178 : vector<8x128xf32>
    %cst_44 = arith.constant 1.000000e+00 : f32
    %180 = vector.broadcast %cst_44 : f32 to vector<8x128xf32>
    %181 = arith.addf %180, %179 : vector<8x128xf32>
    %182 = arith.divf %180, %181 : vector<8x128xf32>
    %183 = vector.extract_strided_slice %170 {offsets = [0, 256], sizes = [8, 128], strides = [1, 1]} : vector<8x512xf32> to vector<8x128xf32>
    %184 = math.tanh %183 : vector<8x128xf32>
    %185 = vector.extract_strided_slice %170 {offsets = [0, 384], sizes = [8, 128], strides = [1, 1]} : vector<8x512xf32> to vector<8x128xf32>
    %186 = arith.negf %185 : vector<8x128xf32>
    %187 = math.exp %186 : vector<8x128xf32>
    %cst_45 = arith.constant 1.000000e+00 : f32
    %188 = vector.broadcast %cst_45 : f32 to vector<8x128xf32>
    %189 = arith.addf %188, %187 : vector<8x128xf32>
    %190 = arith.divf %188, %189 : vector<8x128xf32>
    %191 = arith.mulf %182, %162 : vector<8x128xf32>
    %192 = arith.mulf %176, %184 : vector<8x128xf32>
    %193 = arith.addf %191, %192 : vector<8x128xf32>
    %194 = math.tanh %193 : vector<8x128xf32>
    %195 = arith.mulf %190, %194 : vector<8x128xf32>
    %c6_i32 = arith.constant 6 : i32
    %c8_i32_46 = arith.constant 8 : i32
    %196 = arith.muli %c6_i32, %c8_i32_46 : i32
    %197 = tpu.assume_multiple %196, 8 : i32
    %198 = arith.index_cast %197 : i32 to index
    %c0_47 = arith.constant 0 : index
    %199 = vector.load %arg7[%198, %c0_47] : memref<64x512xf32, #tpu.memory_space<vmem>>, vector<8x512xf32>
    %cst_48 = arith.constant dense<0.000000e+00> : vector<8x512xf32>
    %200 = tpu.matmul %195, %7, %cst_48 {dimension_numbers = #tpu.dot_dimension_numbers<[1], [0], [0], [1], [0, 0, 1, 1], [], []>} : vector<8x128xf32>, vector<128x512xf32>, vector<8x512xf32> -> vector<8x512xf32>
    %201 = arith.addf %199, %200 : vector<8x512xf32>
    %202 = vector.extract_strided_slice %201 {offsets = [0, 0], sizes = [8, 128], strides = [1, 1]} : vector<8x512xf32> to vector<8x128xf32>
    %203 = arith.negf %202 : vector<8x128xf32>
    %204 = math.exp %203 : vector<8x128xf32>
    %cst_49 = arith.constant 1.000000e+00 : f32
    %205 = vector.broadcast %cst_49 : f32 to vector<8x128xf32>
    %206 = arith.addf %205, %204 : vector<8x128xf32>
    %207 = arith.divf %205, %206 : vector<8x128xf32>
    %208 = vector.extract_strided_slice %201 {offsets = [0, 128], sizes = [8, 128], strides = [1, 1]} : vector<8x512xf32> to vector<8x128xf32>
    %209 = arith.negf %208 : vector<8x128xf32>
    %210 = math.exp %209 : vector<8x128xf32>
    %cst_50 = arith.constant 1.000000e+00 : f32
    %211 = vector.broadcast %cst_50 : f32 to vector<8x128xf32>
    %212 = arith.addf %211, %210 : vector<8x128xf32>
    %213 = arith.divf %211, %212 : vector<8x128xf32>
    %214 = vector.extract_strided_slice %201 {offsets = [0, 256], sizes = [8, 128], strides = [1, 1]} : vector<8x512xf32> to vector<8x128xf32>
    %215 = math.tanh %214 : vector<8x128xf32>
    %216 = vector.extract_strided_slice %201 {offsets = [0, 384], sizes = [8, 128], strides = [1, 1]} : vector<8x512xf32> to vector<8x128xf32>
    %217 = arith.negf %216 : vector<8x128xf32>
    %218 = math.exp %217 : vector<8x128xf32>
    %cst_51 = arith.constant 1.000000e+00 : f32
    %219 = vector.broadcast %cst_51 : f32 to vector<8x128xf32>
    %220 = arith.addf %219, %218 : vector<8x128xf32>
    %221 = arith.divf %219, %220 : vector<8x128xf32>
    %222 = arith.mulf %213, %193 : vector<8x128xf32>
    %223 = arith.mulf %207, %215 : vector<8x128xf32>
    %224 = arith.addf %222, %223 : vector<8x128xf32>
    %225 = math.tanh %224 : vector<8x128xf32>
    %226 = arith.mulf %221, %225 : vector<8x128xf32>
    %c7_i32 = arith.constant 7 : i32
    %c8_i32_52 = arith.constant 8 : i32
    %227 = arith.muli %c7_i32, %c8_i32_52 : i32
    %228 = tpu.assume_multiple %227, 8 : i32
    %229 = arith.index_cast %228 : i32 to index
    %c0_53 = arith.constant 0 : index
    %230 = vector.load %arg7[%229, %c0_53] : memref<64x512xf32, #tpu.memory_space<vmem>>, vector<8x512xf32>
    %cst_54 = arith.constant dense<0.000000e+00> : vector<8x512xf32>
    %231 = tpu.matmul %226, %7, %cst_54 {dimension_numbers = #tpu.dot_dimension_numbers<[1], [0], [0], [1], [0, 0, 1, 1], [], []>} : vector<8x128xf32>, vector<128x512xf32>, vector<8x512xf32> -> vector<8x512xf32>
    %232 = arith.addf %230, %231 : vector<8x512xf32>
    %233 = vector.extract_strided_slice %232 {offsets = [0, 0], sizes = [8, 128], strides = [1, 1]} : vector<8x512xf32> to vector<8x128xf32>
    %234 = arith.negf %233 : vector<8x128xf32>
    %235 = math.exp %234 : vector<8x128xf32>
    %cst_55 = arith.constant 1.000000e+00 : f32
    %236 = vector.broadcast %cst_55 : f32 to vector<8x128xf32>
    %237 = arith.addf %236, %235 : vector<8x128xf32>
    %238 = arith.divf %236, %237 : vector<8x128xf32>
    %239 = vector.extract_strided_slice %232 {offsets = [0, 128], sizes = [8, 128], strides = [1, 1]} : vector<8x512xf32> to vector<8x128xf32>
    %240 = arith.negf %239 : vector<8x128xf32>
    %241 = math.exp %240 : vector<8x128xf32>
    %cst_56 = arith.constant 1.000000e+00 : f32
    %242 = vector.broadcast %cst_56 : f32 to vector<8x128xf32>
    %243 = arith.addf %242, %241 : vector<8x128xf32>
    %244 = arith.divf %242, %243 : vector<8x128xf32>
    %245 = vector.extract_strided_slice %232 {offsets = [0, 256], sizes = [8, 128], strides = [1, 1]} : vector<8x512xf32> to vector<8x128xf32>
    %246 = math.tanh %245 : vector<8x128xf32>
    %247 = vector.extract_strided_slice %232 {offsets = [0, 384], sizes = [8, 128], strides = [1, 1]} : vector<8x512xf32> to vector<8x128xf32>
    %248 = arith.negf %247 : vector<8x128xf32>
    %249 = math.exp %248 : vector<8x128xf32>
    %cst_57 = arith.constant 1.000000e+00 : f32
    %250 = vector.broadcast %cst_57 : f32 to vector<8x128xf32>
    %251 = arith.addf %250, %249 : vector<8x128xf32>
    %252 = arith.divf %250, %251 : vector<8x128xf32>
    %253 = arith.mulf %244, %224 : vector<8x128xf32>
    %254 = arith.mulf %238, %246 : vector<8x128xf32>
    %255 = arith.addf %253, %254 : vector<8x128xf32>
    %256 = math.tanh %255 : vector<8x128xf32>
    %257 = arith.mulf %252, %256 : vector<8x128xf32>
    %c8_i32_58 = arith.constant 8 : i32
    %c0_59 = arith.constant 0 : index
    %c0_60 = arith.constant 0 : index
    %258 = vector.load %arg4[%c0_59, %c0_60] : memref<128x128xf32, #tpu.memory_space<vmem>>, vector<128x128xf32>
    %cst_61 = arith.constant dense<0.000000e+00> : vector<8x128xf32>
    %259 = tpu.matmul %257, %258, %cst_61 {dimension_numbers = #tpu.dot_dimension_numbers<[1], [0], [0], [1], [0, 0, 1, 1], [], []>} : vector<8x128xf32>, vector<128x128xf32>, vector<8x128xf32> -> vector<8x128xf32>
    %c0_62 = arith.constant 0 : index
    %c0_63 = arith.constant 0 : index
    %260 = vector.load %arg5[%c0_62, %c0_63] : memref<1x128xf32, #tpu.memory_space<vmem>>, vector<1x128xf32>
    %261 = vector.broadcast %260 : vector<1x128xf32> to vector<8x128xf32>
    %262 = arith.addf %259, %261 : vector<8x128xf32>
    %c0_64 = arith.constant 0 : index
    %c0_65 = arith.constant 0 : index
    %263 = vector.load %arg6[%c0_64, %c0_65] : memref<8x128xf32, #tpu.memory_space<vmem>>, vector<8x128xf32>
    tpu.vector_store %arg6[%c0_64, %c0_65], %262 {strides = array<i32>} : memref<8x128xf32, #tpu.memory_space<vmem>>, vector<8x128xf32>,
    return
  }
}

</mosaic_0001>

<llo_original>
// kernel: forward.1
$region0: #{forward.1}
  #allocation0 [shape = 'u32[]', space=smem, size = 0x4, offset = 0x4, fixed_abs, tag = 'smem constant byte address 0x4 - core index']
  #allocation1 [shape = 'u32[144,128]{1,0:T(1,128)}', space=vmem, size = 0x12000, scoped, tag = 'internal scratch']
  #allocation2 [shape = 'f32[64,512]{1,0:T(8,128)}', space=vmem, size = 0x20000, scoped, tag = 'scratch operand']
  %s0 = inlined_call_operand.vmem [shape: f32[64,4], index: 0, kind: input, shape index: {}]
  %s1 = inlined_call_operand.vmem [shape: f32[4,512], index: 1, kind: input, shape index: {}]
  %s2 = inlined_call_operand.hbm [shape: f32[128,512], index: 2, kind: input, shape index: {}]
  %s3 = inlined_call_operand.vmem [shape: f32[1,512], index: 3, kind: input, shape index: {}]
  %s4 = inlined_call_operand.hbm [shape: f32[128,128], index: 4, kind: input, shape index: {}]
  %s5 = inlined_call_operand.vmem [shape: f32[1,128], index: 5, kind: input, shape index: {}]
  %s6 = inlined_call_operand.vmem [shape: f32[8,128], index: 6, kind: output, shape index: {}]
  %s7 = sld [smem:[#allocation0]]
  $region42: #{forward.1} parent=0
    _
  %s9 = ssub.s32 1, %s7
  %s10 = scalar_select 0, %s9, %s7
  $region1: #{forward.1} parent=0
    #allocation3 [shape = 'u8[262144]{0}', space=vmem, size = 0x40000, scoped, tag = 'input window, operand 2, single buffered']
    #allocation4 [shape = 's32[1]{0}', space=sflag, size = 0x4, scoped, tag = 'scoped memory for forward.1']
    #allocation5 [shape = 'u8[65536]{0}', space=vmem, size = 0x10000, scoped, tag = 'input window, operand 4, single buffered']
    #allocation6 [shape = 's32[1]{0}', space=sflag, size = 0x4, scoped, tag = 'scoped memory for forward.1']
    %11 = vsyncpa [#allocation4], 0
    %12 = vsyncpa [#allocation6], 0
    // Predicated region
    $region2: #{forward.1} parent=1 // pred_check
      _
    $region3: #{forward.1} parent=1 // pred_check_branch
      %14 = sbr.rel (0) target = $region5
    $region4: #{forward.1} parent=1 // pred_region
      _
    $region5: #{forward.1} parent=1 // pred_fallthru
      _
    // Predicated region
    $region6: #{forward.1} parent=1 // pred_check
      _
    $region7: #{forward.1} parent=1 // pred_check_branch
      %16 = sbr.rel (0) target = $region9
    $region8: #{forward.1} parent=1 // pred_region
      _
    $region9: #{forward.1} parent=1 // pred_fallthru
      _
    // Predicated region
    $region10: #{forward.1} parent=1 // pred_check
      _
    $region11: #{forward.1} parent=1 // pred_check_branch
      %18 = sbr.rel (0) target = $region13
    $region12: #{forward.1} parent=1 // pred_region
      %s20 = ssub.s32 8192, 8192
      %21 = vsyncadd [#allocation4], %s20
      %s22 = sshll.u32 [#allocation3], 4
      %s23 = int_to_ptr.vmem [resolvable:$true] %s22
      %28 = dma.hbm_to_vmem [thread:$0]  %s2, 8192, %s23, [#allocation4], 512, 512, 32
    $region13: #{forward.1} parent=1 // pred_fallthru
      _
    // Predicated region
    $region14: #{forward.1} parent=1 // pred_check
      _
    $region15: #{forward.1} parent=1 // pred_check_branch
      %30 = sbr.rel (0) target = $region17
    $region16: #{forward.1} parent=1 // pred_region
      _
    $region17: #{forward.1} parent=1 // pred_fallthru
      _
    // Predicated region
    $region18: #{forward.1} parent=1 // pred_check
      _
    $region19: #{forward.1} parent=1 // pred_check_branch
      %32 = sbr.rel (0) target = $region21
    $region20: #{forward.1} parent=1 // pred_region
      %s34 = ssub.s32 2048, 2048
      %35 = vsyncadd [#allocation6], %s34
      %s36 = sshll.u32 [#allocation5], 4
      %s37 = int_to_ptr.vmem [resolvable:$true] %s36
      %42 = dma.hbm_to_vmem [thread:$0]  %s4, 2048, %s37, [#allocation6], 128, 128, 8
    $region21: #{forward.1} parent=1 // pred_fallthru
      _
    // Predicated region
    $region22: #{forward.1} parent=1 // pred_check
      _
    $region23: #{forward.1} parent=1 // pred_check_branch
      %44 = sbr.rel (0) target = $region25
    $region24: #{forward.1} parent=1 // pred_region
      _
    $region25: #{forward.1} parent=1 // pred_fallthru
      _
    // Predicated region
    $region26: #{forward.1} parent=1 // pred_check
      _
    $region27: #{forward.1} parent=1 // pred_check_branch
      %46 = sbr.rel (0) target = $region29
    $region28: #{forward.1} parent=1 // pred_region
      %47 = dma.done [#allocation4], 8192
    $region29: #{forward.1} parent=1 // pred_fallthru
      _
    // Predicated region
    $region30: #{forward.1} parent=1 // pred_check
      _
    $region31: #{forward.1} parent=1 // pred_check_branch
      %49 = sbr.rel (0) target = $region33
    $region32: #{forward.1} parent=1 // pred_region
      %50 = dma.done [#allocation6], 2048
    $region33: #{forward.1} parent=1 // pred_fallthru
      _
    %v51 = vld [vmem:[%s0] sm:$0xff]
    %v52 = vld [vmem:[%s0 + $0x8] sm:$0xff]
    %v53 = vld [vmem:[%s0 + $0x10] sm:$0xff]
    %v54 = vld [vmem:[%s0 + $0x18] sm:$0xff]
    %v55 = vld [vmem:[%s0 + $0x20] sm:$0xff]
    %v56 = vld [vmem:[%s0 + $0x28] sm:$0xff]
    %v57 = vld [vmem:[%s0 + $0x30] sm:$0xff]
    %v58 = vld [vmem:[%s0 + $0x38] sm:$0xff]
    %v59 = vld [vmem:[%s1] sm:$0xff]
    %v60 = vld [vmem:[%s1 + $0x8] sm:$0xff]
    %v61 = vld [vmem:[%s3] sm:$0xf]
    %v63 = vlaneseq
    %v64 = vshrl.u32 %v63, 7
    %v65 = vsub.s32 0, %v64
    %v66 = vrot.slane %v61, %v65
    %v67 = vlaneseq
    %v68 = vshrl.u32 %v67, 7
    %v69 = vsub.s32 1, %v68
    %v70 = vrot.slane %v61, %v69
    %v71 = vlaneseq
    %v72 = vshrl.u32 %v71, 7
    %v73 = vsub.s32 2, %v72
    %v74 = vrot.slane %v61, %v73
    %v75 = vlaneseq
    %v76 = vshrl.u32 %v75, 7
    %v77 = vsub.s32 3, %v76
    %v78 = vrot.slane %v61, %v77
    %v85 = vcombine.high %v59, %v59
    %v86 = vcombine.high %v60, %v60
    %vm87 = vcmask 31744
    %v89 = vsel %vm87, %v51, 0
    %v92 = vsel %vm87, %v52, 0
    %v95 = vsel %vm87, %v53, 0
    %v98 = vsel %vm87, %v54, 0
    %v101 = vsel %vm87, %v55, 0
    %v104 = vsel %vm87, %v56, 0
    %v107 = vsel %vm87, %v57, 0
    %v110 = vsel %vm87, %v58, 0
    %vm112 = vcmask 1043456
    %v113 = vsel %vm112, %v59, 0
    %v115 = vsel %vm112, %v85, 0
    %v117 = vsel %vm112, %v60, 0
    %v119 = vsel %vm112, %v86, 0
    %121 = vmatprep.subr.mxu0 %v115
    %122 = vmatpush1.msra.mxu0 %v113
    %123 = vmatprep.subr.mxu0 0.0
    %124 = vmatpush1.msra.mxu0 0.0
    %125 = vmatprep.subr.mxu0 0.0
    %126 = vmatpush1.msra.mxu0 0.0
    %127 = vmatprep.subr.mxu0 0.0
    %128 = vmatpush1.msra.mxu0 0.0
    %129 = vmatprep.subr.mxu0 0.0
    %130 = vmatpush1.msra.mxu0 0.0
    %131 = vmatprep.subr.mxu0 0.0
    %132 = vmatpush1.msra.mxu0 0.0
    %133 = vmatprep.subr.mxu0 0.0
    %134 = vmatpush1.msra.mxu0 0.0
    %135 = vmatprep.subr.mxu0 0.0
    %136 = vmatpush1.msra.mxu0 0.0
    %137 = vmatprep.subr.mxu0 0.0
    %138 = vmatpush1.msra.mxu0 0.0
    %139 = vmatprep.subr.mxu0 0.0
    %140 = vmatpush1.msra.mxu0 0.0
    %141 = vmatprep.subr.mxu0 0.0
    %142 = vmatpush1.msra.mxu0 0.0
    %143 = vmatprep.subr.mxu0 0.0
    %144 = vmatpush1.msra.mxu0 0.0
    %145 = vmatprep.subr.mxu0 0.0
    %146 = vmatpush1.msra.mxu0 0.0
    %147 = vmatprep.subr.mxu0 0.0
    %148 = vmatpush1.msra.mxu0 0.0
    %149 = vmatprep.subr.mxu0 0.0
    %150 = vmatpush1.msra.mxu0 0.0
    %151 = vmatprep.subr.mxu0 0.0
    %152 = vmatpush1.msra.mxu0 0.0
    %153 = vmatprep.subr.mxu0 0.0
    %154 = vmatpush1.msra.mxu0 0.0
    %155 = vmatprep.subr.mxu0 0.0
    %156 = vmatpush1.msra.mxu0 0.0
    %157 = vmatprep.subr.mxu0 0.0
    %158 = vmatpush1.msra.mxu0 0.0
    %159 = vmatprep.subr.mxu0 0.0
    %160 = vmatpush1.msra.mxu0 0.0
    %161 = vmatprep.subr.mxu0 0.0
    %162 = vmatpush1.msra.mxu0 0.0
    %163 = vmatprep.subr.mxu0 0.0
    %164 = vmatpush1.msra.mxu0 0.0
    %165 = vmatprep.subr.mxu0 0.0
    %166 = vmatpush1.msra.mxu0 0.0
    %167 = vmatprep.subr.mxu0 0.0
    %168 = vmatpush1.msra.mxu0 0.0
    %169 = vmatprep.subr.mxu0 0.0
    %170 = vmatpush1.msra.mxu0 0.0
    %171 = vmatprep.subr.mxu0 0.0
    %172 = vmatpush1.msra.mxu0 0.0
    %173 = vmatprep.subr.mxu0 0.0
    %174 = vmatpush1.msra.mxu0 0.0
    %175 = vmatprep.subr.mxu0 0.0
    %176 = vmatpush1.msra.mxu0 0.0
    %177 = vmatprep.subr.mxu0 0.0
    %178 = vmatpush1.msra.mxu0 0.0
    %179 = vmatprep.subr.mxu0 0.0
    %180 = vmatpush1.msra.mxu0 0.0
    %181 = vmatprep.subr.mxu0 0.0
    %182 = vmatpush1.msra.mxu0 0.0
    %183 = vmatprep.subr.mxu0 0.0
    %184 = vmatpush1.msra.mxu0 0.0
    %185 = vmatprep.mubr.f32.mxu0 0.0
    %186 = vmatmul.mubr.f32.gmra.mrb[0].mxu0 %v89
    %v187 = vpop.f32.mrb[0].mxu0
    %v188 = vadd.f32 %v66, %v187
    %v189 = vpop.f32.mrb[0].mxu0
    %v190 = vadd.f32 %v70, %v189
    %191 = vmatprep.mubr.f32.mxu0 0.0
    %192 = vmatmul.mubr.f32.gmra.mrb[0].mxu0 %v92
    %v193 = vpop.f32.mrb[0].mxu0
    %v194 = vadd.f32 %v66, %v193
    %v195 = vpop.f32.mrb[0].mxu0
    %v196 = vadd.f32 %v70, %v195
    %197 = vmatprep.mubr.f32.mxu0 0.0
    %198 = vmatmul.mubr.f32.gmra.mrb[0].mxu0 %v95
    %v199 = vpop.f32.mrb[0].mxu0
    %v200 = vadd.f32 %v66, %v199
    %v201 = vpop.f32.mrb[0].mxu0
    %v202 = vadd.f32 %v70, %v201
    %203 = vmatprep.mubr.f32.mxu0 0.0
    %204 = vmatmul.mubr.f32.gmra.mrb[0].mxu0 %v98
    %v205 = vpop.f32.mrb[0].mxu0
    %v206 = vadd.f32 %v66, %v205
    %v207 = vpop.f32.mrb[0].mxu0
    %v208 = vadd.f32 %v70, %v207
    %209 = vmatprep.mubr.f32.mxu0 0.0
    %210 = vmatmul.mubr.f32.gmra.mrb[0].mxu0 %v101
    %v211 = vpop.f32.mrb[0].mxu0
    %v212 = vadd.f32 %v66, %v211
    %v213 = vpop.f32.mrb[0].mxu0
    %v214 = vadd.f32 %v70, %v213
    %215 = vmatprep.mubr.f32.mxu0 0.0
    %216 = vmatmul.mubr.f32.gmra.mrb[0].mxu0 %v104
    %v217 = vpop.f32.mrb[0].mxu0
    %v218 = vadd.f32 %v66, %v217
    %v219 = vpop.f32.mrb[0].mxu0
    %v220 = vadd.f32 %v70, %v219
    %221 = vmatprep.mubr.f32.mxu0 0.0
    %222 = vmatmul.mubr.f32.gmra.mrb[0].mxu0 %v107
    %v223 = vpop.f32.mrb[0].mxu0
    %v224 = vadd.f32 %v66, %v223
    %v225 = vpop.f32.mrb[0].mxu0
    %v226 = vadd.f32 %v70, %v225
    %227 = vmatprep.mubr.f32.mxu0 0.0
    %228 = vmatmul.mubr.f32.gmra.mrb[0].mxu0 %v110
    %v229 = vpop.f32.mrb[0].mxu0
    %v230 = vadd.f32 %v66, %v229
    %v231 = vpop.f32.mrb[0].mxu0
    %v232 = vadd.f32 %v70, %v231
    %233 = vdwg.mxu0
    %234 = vmatprep.subr.mxu0 %v119
    %235 = vmatpush1.msra.mxu0 %v117
    %236 = vmatprep.subr.mxu0 0.0
    %237 = vmatpush1.msra.mxu0 0.0
    %238 = vmatprep.subr.mxu0 0.0
    %239 = vmatpush1.msra.mxu0 0.0
    %240 = vmatprep.subr.mxu0 0.0
    %241 = vmatpush1.msra.mxu0 0.0
    %242 = vmatprep.subr.mxu0 0.0
    %243 = vmatpush1.msra.mxu0 0.0
    %244 = vmatprep.subr.mxu0 0.0
    %245 = vmatpush1.msra.mxu0 0.0
    %246 = vmatprep.subr.mxu0 0.0
    %247 = vmatpush1.msra.mxu0 0.0
    %248 = vmatprep.subr.mxu0 0.0
    %249 = vmatpush1.msra.mxu0 0.0
    %250 = vmatprep.subr.mxu0 0.0
    %251 = vmatpush1.msra.mxu0 0.0
    %252 = vmatprep.subr.mxu0 0.0
    %253 = vmatpush1.msra.mxu0 0.0
    %254 = vmatprep.subr.mxu0 0.0
    %255 = vmatpush1.msra.mxu0 0.0
    %256 = vmatprep.subr.mxu0 0.0
    %257 = vmatpush1.msra.mxu0 0.0
    %258 = vmatprep.subr.mxu0 0.0
    %259 = vmatpush1.msra.mxu0 0.0
    %260 = vmatprep.subr.mxu0 0.0
    %261 = vmatpush1.msra.mxu0 0.0
    %262 = vmatprep.subr.mxu0 0.0
    %263 = vmatpush1.msra.mxu0 0.0
    %264 = vmatprep.subr.mxu0 0.0
    %265 = vmatpush1.msra.mxu0 0.0
    %266 = vmatprep.subr.mxu0 0.0
    %267 = vmatpush1.msra.mxu0 0.0
    %268 = vmatprep.subr.mxu0 0.0
    %269 = vmatpush1.msra.mxu0 0.0
    %270 = vmatprep.subr.mxu0 0.0
    %271 = vmatpush1.msra.mxu0 0.0
    %272 = vmatprep.subr.mxu0 0.0
    %273 = vmatpush1.msra.mxu0 0.0
    %274 = vmatprep.subr.mxu0 0.0
    %275 = vmatpush1.msra.mxu0 0.0
    %276 = vmatprep.subr.mxu0 0.0
    %277 = vmatpush1.msra.mxu0 0.0
    %278 = vmatprep.subr.mxu0 0.0
    %279 = vmatpush1.msra.mxu0 0.0
    %280 = vmatprep.subr.mxu0 0.0
    %281 = vmatpush1.msra.mxu0 0.0
    %282 = vmatprep.subr.mxu0 0.0
    %283 = vmatpush1.msra.mxu0 0.0
    %284 = vmatprep.subr.mxu0 0.0
    %285 = vmatpush1.msra.mxu0 0.0
    %286 = vmatprep.subr.mxu0 0.0
    %287 = vmatpush1.msra.mxu0 0.0
    %288 = vmatprep.subr.mxu0 0.0
    %289 = vmatpush1.msra.mxu0 0.0
    %290 = vmatprep.subr.mxu0 0.0
    %291 = vmatpush1.msra.mxu0 0.0
    %292 = vmatprep.subr.mxu0 0.0
    %293 = vmatpush1.msra.mxu0 0.0
    %294 = vmatprep.subr.mxu0 0.0
    %295 = vmatpush1.msra.mxu0 0.0
    %296 = vmatprep.subr.mxu0 0.0
    %297 = vmatpush1.msra.mxu0 0.0
    %298 = vmatprep.mubr.f32.mxu0 0.0
    %299 = vmatmul.mubr.f32.gmra.mrb[0].mxu0 %v89
    %v300 = vpop.f32.mrb[0].mxu0
    %v301 = vadd.f32 %v74, %v300
    %v302 = vpop.f32.mrb[0].mxu0
    %v303 = vadd.f32 %v78, %v302
    %304 = vmatprep.mubr.f32.mxu0 0.0
    %305 = vmatmul.mubr.f32.gmra.mrb[0].mxu0 %v92
    %v306 = vpop.f32.mrb[0].mxu0
    %v307 = vadd.f32 %v74, %v306
    %v308 = vpop.f32.mrb[0].mxu0
    %v309 = vadd.f32 %v78, %v308
    %310 = vmatprep.mubr.f32.mxu0 0.0
    %311 = vmatmul.mubr.f32.gmra.mrb[0].mxu0 %v95
    %v312 = vpop.f32.mrb[0].mxu0
    %v313 = vadd.f32 %v74, %v312
    %v314 = vpop.f32.mrb[0].mxu0
    %v315 = vadd.f32 %v78, %v314
    %316 = vmatprep.mubr.f32.mxu0 0.0
    %317 = vmatmul.mubr.f32.gmra.mrb[0].mxu0 %v98
    %v318 = vpop.f32.mrb[0].mxu0
    %v319 = vadd.f32 %v74, %v318
    %v320 = vpop.f32.mrb[0].mxu0
    %v321 = vadd.f32 %v78, %v320
    %322 = vmatprep.mubr.f32.mxu0 0.0
    %323 = vmatmul.mubr.f32.gmra.mrb[0].mxu0 %v101
    %v324 = vpop.f32.mrb[0].mxu0
    %v325 = vadd.f32 %v74, %v324
    %v326 = vpop.f32.mrb[0].mxu0
    %v327 = vadd.f32 %v78, %v326
    %328 = vmatprep.mubr.f32.mxu0 0.0
    %329 = vmatmul.mubr.f32.gmra.mrb[0].mxu0 %v104
    %v330 = vpop.f32.mrb[0].mxu0
    %v331 = vadd.f32 %v74, %v330
    %v332 = vpop.f32.mrb[0].mxu0
    %v333 = vadd.f32 %v78, %v332
    %334 = vmatprep.mubr.f32.mxu0 0.0
    %335 = vmatmul.mubr.f32.gmra.mrb[0].mxu0 %v107
    %v336 = vpop.f32.mrb[0].mxu0
    %v337 = vadd.f32 %v74, %v336
    %v338 = vpop.f32.mrb[0].mxu0
    %v339 = vadd.f32 %v78, %v338
    %340 = vmatprep.mubr.f32.mxu0 0.0
    %341 = vmatmul.mubr.f32.gmra.mrb[0].mxu0 %v110
    %v342 = vpop.f32.mrb[0].mxu0
    %v343 = vadd.f32 %v74, %v342
    %v344 = vpop.f32.mrb[0].mxu0
    %v345 = vadd.f32 %v78, %v344
    %346 = vdwg.mxu0
    %347 = vst [vmem:[#allocation2] sm:$0xff] %v188
    %348 = vst [vmem:[#allocation2 + $0x8] sm:$0xff] %v190
    %349 = vst [vmem:[#allocation2 + $0x10] sm:$0xff] %v301
    %350 = vst [vmem:[#allocation2 + $0x18] sm:$0xff] %v303
    %351 = vst [vmem:[#allocation2 + $0x20] sm:$0xff] %v194
    %352 = vst [vmem:[#allocation2 + $0x28] sm:$0xff] %v196
    %353 = vst [vmem:[#allocation2 + $0x30] sm:$0xff] %v307
    %354 = vst [vmem:[#allocation2 + $0x38] sm:$0xff] %v309
    %355 = vst [vmem:[#allocation2 + $0x40] sm:$0xff] %v200
    %356 = vst [vmem:[#allocation2 + $0x48] sm:$0xff] %v202
    %357 = vst [vmem:[#allocation2 + $0x50] sm:$0xff] %v313
    %358 = vst [vmem:[#allocation2 + $0x58] sm:$0xff] %v315
    %359 = vst [vmem:[#allocation2 + $0x60] sm:$0xff] %v206
    %360 = vst [vmem:[#allocation2 + $0x68] sm:$0xff] %v208
    %361 = vst [vmem:[#allocation2 + $0x70] sm:$0xff] %v319
    %362 = vst [vmem:[#allocation2 + $0x78] sm:$0xff] %v321
    %363 = vst [vmem:[#allocation2 + $0x80] sm:$0xff] %v212
    %364 = vst [vmem:[#allocation2 + $0x88] sm:$0xff] %v214
    %365 = vst [vmem:[#allocation2 + $0x90] sm:$0xff] %v325
    %366 = vst [vmem:[#allocation2 + $0x98] sm:$0xff] %v327
    %367 = vst [vmem:[#allocation2 + $0xa0] sm:$0xff] %v218
    %368 = vst [vmem:[#allocation2 + $0xa8] sm:$0xff] %v220
    %369 = vst [vmem:[#allocation2 + $0xb0] sm:$0xff] %v331
    %370 = vst [vmem:[#allocation2 + $0xb8] sm:$0xff] %v333
    %371 = vst [vmem:[#allocation2 + $0xc0] sm:$0xff] %v224
    %372 = vst [vmem:[#allocation2 + $0xc8] sm:$0xff] %v226
    %373 = vst [vmem:[#allocation2 + $0xd0] sm:$0xff] %v337
    %374 = vst [vmem:[#allocation2 + $0xd8] sm:$0xff] %v339
    %375 = vst [vmem:[#allocation2 + $0xe0] sm:$0xff] %v230
    %376 = vst [vmem:[#allocation2 + $0xe8] sm:$0xff] %v232
    %377 = vst [vmem:[#allocation2 + $0xf0] sm:$0xff] %v343
    %378 = vst [vmem:[#allocation2 + $0xf8] sm:$0xff] %v345
    %v379 = vld [vmem:[#allocation3] sm:$0xff]
    %v380 = vld [vmem:[#allocation3 + $0x8] sm:$0xff]
    %v381 = vld [vmem:[#allocation3 + $0x10] sm:$0xff]
    %v382 = vld [vmem:[#allocation3 + $0x18] sm:$0xff]
    %v383 = vld [vmem:[#allocation3 + $0x20] sm:$0xff]
    %v384 = vld [vmem:[#allocation3 + $0x28] sm:$0xff]
    %v385 = vld [vmem:[#allocation3 + $0x30] sm:$0xff]
    %v386 = vld [vmem:[#allocation3 + $0x38] sm:$0xff]
    %v387 = vld [vmem:[#allocation3 + $0x40] sm:$0xff]
    %v388 = vld [vmem:[#allocation3 + $0x48] sm:$0xff]
    %v389 = vld [vmem:[#allocation3 + $0x50] sm:$0xff]
    %v390 = vld [vmem:[#allocation3 + $0x58] sm:$0xff]
    %v391 = vld [vmem:[#allocation3 + $0x60] sm:$0xff]
    %v392 = vld [vmem:[#allocation3 + $0x68] sm:$0xff]
    %v393 = vld [vmem:[#allocation3 + $0x70] sm:$0xff]
    %v394 = vld [vmem:[#allocation3 + $0x78] sm:$0xff]
    %v395 = vld [vmem:[#allocation3 + $0x80] sm:$0xff]
    %v396 = vld [vmem:[#allocation3 + $0x88] sm:$0xff]
    %v397 = vld [vmem:[#allocation3 + $0x90] sm:$0xff]
    %v398 = vld [vmem:[#allocation3 + $0x98] sm:$0xff]
    %v399 = vld [vmem:[#allocation3 + $0xa0] sm:$0xff]
    %v400 = vld [vmem:[#allocation3 + $0xa8] sm:$0xff]
    %v401 = vld [vmem:[#allocation3 + $0xb0] sm:$0xff]
    %v402 = vld [vmem:[#allocation3 + $0xb8] sm:$0xff]
    %v403 = vld [vmem:[#allocation3 + $0xc0] sm:$0xff]
    %v404 = vld [vmem:[#allocation3 + $0xc8] sm:$0xff]
    %v405 = vld [vmem:[#allocation3 + $0xd0] sm:$0xff]
    %v406 = vld [vmem:[#allocation3 + $0xd8] sm:$0xff]
    %v407 = vld [vmem:[#allocation3 + $0xe0] sm:$0xff]
    %v408 = vld [vmem:[#allocation3 + $0xe8] sm:$0xff]
    %v409 = vld [vmem:[#allocation3 + $0xf0] sm:$0xff]
    %v410 = vld [vmem:[#allocation3 + $0xf8] sm:$0xff]
    %v411 = vld [vmem:[#allocation3 + $0x100] sm:$0xff]
    %v412 = vld [vmem:[#allocation3 + $0x108] sm:$0xff]
    %v413 = vld [vmem:[#allocation3 + $0x110] sm:$0xff]
    %v414 = vld [vmem:[#allocation3 + $0x118] sm:$0xff]
    %v415 = vld [vmem:[#allocation3 + $0x120] sm:$0xff]
    %v416 = vld [vmem:[#allocation3 + $0x128] sm:$0xff]
    %v417 = vld [vmem:[#allocation3 + $0x130] sm:$0xff]
    %v418 = vld [vmem:[#allocation3 + $0x138] sm:$0xff]
    %v419 = vld [vmem:[#allocation3 + $0x140] sm:$0xff]
    %v420 = vld [vmem:[#allocation3 + $0x148] sm:$0xff]
    %v421 = vld [vmem:[#allocation3 + $0x150] sm:$0xff]
    %v422 = vld [vmem:[#allocation3 + $0x158] sm:$0xff]
    %v423 = vld [vmem:[#allocation3 + $0x160] sm:$0xff]
    %v424 = vld [vmem:[#allocation3 + $0x168] sm:$0xff]
    %v425 = vld [vmem:[#allocation3 + $0x170] sm:$0xff]
    %v426 = vld [vmem:[#allocation3 + $0x178] sm:$0xff]
    %v427 = vld [vmem:[#allocation3 + $0x180] sm:$0xff]
    %v428 = vld [vmem:[#allocation3 + $0x188] sm:$0xff]
    %v429 = vld [vmem:[#allocation3 + $0x190] sm:$0xff]
    %v430 = vld [vmem:[#allocation3 + $0x198] sm:$0xff]
    %v431 = vld [vmem:[#allocation3 + $0x1a0] sm:$0xff]
    %v432 = vld [vmem:[#allocation3 + $0x1a8] sm:$0xff]
    %v433 = vld [vmem:[#allocation3 + $0x1b0] sm:$0xff]
    %v434 = vld [vmem:[#allocation3 + $0x1b8] sm:$0xff]
    %v435 = vld [vmem:[#allocation3 + $0x1c0] sm:$0xff]
    %v436 = vld [vmem:[#allocation3 + $0x1c8] sm:$0xff]
    %v437 = vld [vmem:[#allocation3 + $0x1d0] sm:$0xff]
    %v438 = vld [vmem:[#allocation3 + $0x1d8] sm:$0xff]
    %v439 = vld [vmem:[#allocation3 + $0x1e0] sm:$0xff]
    %v440 = vld [vmem:[#allocation3 + $0x1e8] sm:$0xff]
    %v441 = vld [vmem:[#allocation3 + $0x1f0] sm:$0xff]
    %v442 = vld [vmem:[#allocation3 + $0x1f8] sm:$0xff]
    %s443 = smul.u32 0, 4
    %s444 = smul.addr %s443, 8
    %s445 = scalar_lea.vmem [#allocation2], %s444
    %v446 = vld [vmem:[%s445] sm:$0xff]
    %v447 = vld [vmem:[%s445 + $0x8] sm:$0xff]
    %v448 = vld [vmem:[%s445 + $0x10] sm:$0xff]
    %v449 = vld [vmem:[%s445 + $0x18] sm:$0xff]
    %450 = vmatprep.subr.mxu0 %v380
    %451 = vmatpush1.msra.mxu0 %v379
    %452 = vmatprep.subr.mxu0 %v384
    %453 = vmatpush1.msra.mxu0 %v383
    %454 = vmatprep.subr.mxu0 %v388
    %455 = vmatpush1.msra.mxu0 %v387
    %456 = vmatprep.subr.mxu0 %v392
    %457 = vmatpush1.msra.mxu0 %v391
    %458 = vmatprep.subr.mxu0 %v396
    %459 = vmatpush1.msra.mxu0 %v395
    %460 = vmatprep.subr.mxu0 %v400
    %461 = vmatpush1.msra.mxu0 %v399
    %462 = vmatprep.subr.mxu0 %v404
    %463 = vmatpush1.msra.mxu0 %v403
    %464 = vmatprep.subr.mxu0 %v408
    %465 = vmatpush1.msra.mxu0 %v407
    %466 = vmatprep.subr.mxu0 %v412
    %467 = vmatpush1.msra.mxu0 %v411
    %468 = vmatprep.subr.mxu0 %v416
    %469 = vmatpush1.msra.mxu0 %v415
    %470 = vmatprep.subr.mxu0 %v420
    %471 = vmatpush1.msra.mxu0 %v419
    %472 = vmatprep.subr.mxu0 %v424
    %473 = vmatpush1.msra.mxu0 %v423
    %474 = vmatprep.subr.mxu0 %v428
    %475 = vmatpush1.msra.mxu0 %v427
    %476 = vmatprep.subr.mxu0 %v432
    %477 = vmatpush1.msra.mxu0 %v431
    %478 = vmatprep.subr.mxu0 %v436
    %479 = vmatpush1.msra.mxu0 %v435
    %480 = vmatprep.subr.mxu0 %v440
    %481 = vmatpush1.msra.mxu0 %v439
    %482 = vmatprep.subr.mxu0 0.0
    %483 = vmatpush1.msra.mxu0 0.0
    %484 = vmatprep.subr.mxu0 0.0
    %485 = vmatpush1.msra.mxu0 0.0
    %486 = vmatprep.subr.mxu0 0.0
    %487 = vmatpush1.msra.mxu0 0.0
    %488 = vmatprep.subr.mxu0 0.0
    %489 = vmatpush1.msra.mxu0 0.0
    %490 = vmatprep.subr.mxu0 0.0
    %491 = vmatpush1.msra.mxu0 0.0
    %492 = vmatprep.subr.mxu0 0.0
    %493 = vmatpush1.msra.mxu0 0.0
    %494 = vmatprep.subr.mxu0 0.0
    %495 = vmatpush1.msra.mxu0 0.0
    %496 = vmatprep.subr.mxu0 0.0
    %497 = vmatpush1.msra.mxu0 0.0
    %498 = vmatprep.subr.mxu0 0.0
    %499 = vmatpush1.msra.mxu0 0.0
    %500 = vmatprep.subr.mxu0 0.0
    %501 = vmatpush1.msra.mxu0 0.0
    %502 = vmatprep.subr.mxu0 0.0
    %503 = vmatpush1.msra.mxu0 0.0
    %504 = vmatprep.subr.mxu0 0.0
    %505 = vmatpush1.msra.mxu0 0.0
    %506 = vmatprep.subr.mxu0 0.0
    %507 = vmatpush1.msra.mxu0 0.0
    %508 = vmatprep.subr.mxu0 0.0
    %509 = vmatpush1.msra.mxu0 0.0
    %510 = vmatprep.subr.mxu0 0.0
    %511 = vmatpush1.msra.mxu0 0.0
    %512 = vmatprep.subr.mxu0 0.0
    %513 = vmatpush1.msra.mxu0 0.0
    %514 = vmatprep.mubr.f32.mxu0 0.0
    %515 = vmatmul.mubr.f32.gmra.mrb[0].mxu0 0.0
    %v516 = vpop.f32.mrb[0].mxu0
    %v517 = vadd.f32 0.0, %v516
    %v518 = vpop.f32.mrb[0].mxu0
    %v519 = vadd.f32 0.0, %v518
    %520 = vdwg.mxu0
    %521 = vmatprep.subr.mxu0 %v382
    %522 = vmatpush1.msra.mxu0 %v381
    %523 = vmatprep.subr.mxu0 %v386
    %524 = vmatpush1.msra.mxu0 %v385
    %525 = vmatprep.subr.mxu0 %v390
    %526 = vmatpush1.msra.mxu0 %v389
    %527 = vmatprep.subr.mxu0 %v394
    %528 = vmatpush1.msra.mxu0 %v393
    %529 = vmatprep.subr.mxu0 %v398
    %530 = vmatpush1.msra.mxu0 %v397
    %531 = vmatprep.subr.mxu0 %v402
    %532 = vmatpush1.msra.mxu0 %v401
    %533 = vmatprep.subr.mxu0 %v406
    %534 = vmatpush1.msra.mxu0 %v405
    %535 = vmatprep.subr.mxu0 %v410
    %536 = vmatpush1.msra.mxu0 %v409
    %537 = vmatprep.subr.mxu0 %v414
    %538 = vmatpush1.msra.mxu0 %v413
    %539 = vmatprep.subr.mxu0 %v418
    %540 = vmatpush1.msra.mxu0 %v417
    %541 = vmatprep.subr.mxu0 %v422
    %542 = vmatpush1.msra.mxu0 %v421
    %543 = vmatprep.subr.mxu0 %v426
    %544 = vmatpush1.msra.mxu0 %v425
    %545 = vmatprep.subr.mxu0 %v430
    %546 = vmatpush1.msra.mxu0 %v429
    %547 = vmatprep.subr.mxu0 %v434
    %548 = vmatpush1.msra.mxu0 %v433
    %549 = vmatprep.subr.mxu0 %v438
    %550 = vmatpush1.msra.mxu0 %v437
    %551 = vmatprep.subr.mxu0 %v442
    %552 = vmatpush1.msra.mxu0 %v441
    %553 = vmatprep.subr.mxu0 0.0
    %554 = vmatpush1.msra.mxu0 0.0
    %555 = vmatprep.subr.mxu0 0.0
    %556 = vmatpush1.msra.mxu0 0.0
    %557 = vmatprep.subr.mxu0 0.0
    %558 = vmatpush1.msra.mxu0 0.0
    %559 = vmatprep.subr.mxu0 0.0
    %560 = vmatpush1.msra.mxu0 0.0
    %561 = vmatprep.subr.mxu0 0.0
    %562 = vmatpush1.msra.mxu0 0.0
    %563 = vmatprep.subr.mxu0 0.0
    %564 = vmatpush1.msra.mxu0 0.0
    %565 = vmatprep.subr.mxu0 0.0
    %566 = vmatpush1.msra.mxu0 0.0
    %567 = vmatprep.subr.mxu0 0.0
    %568 = vmatpush1.msra.mxu0 0.0
    %569 = vmatprep.subr.mxu0 0.0
    %570 = vmatpush1.msra.mxu0 0.0
    %571 = vmatprep.subr.mxu0 0.0
    %572 = vmatpush1.msra.mxu0 0.0
    %573 = vmatprep.subr.mxu0 0.0
    %574 = vmatpush1.msra.mxu0 0.0
    %575 = vmatprep.subr.mxu0 0.0
    %576 = vmatpush1.msra.mxu0 0.0
    %577 = vmatprep.subr.mxu0 0.0
    %578 = vmatpush1.msra.mxu0 0.0
    %579 = vmatprep.subr.mxu0 0.0
    %580 = vmatpush1.msra.mxu0 0.0
    %581 = vmatprep.subr.mxu0 0.0
    %582 = vmatpush1.msra.mxu0 0.0
    %583 = vmatprep.subr.mxu0 0.0
    %584 = vmatpush1.msra.mxu0 0.0
    %585 = vmatprep.mubr.f32.mxu0 0.0
    %586 = vmatmul.mubr.f32.gmra.mrb[0].mxu0 0.0
    %v587 = vpop.f32.mrb[0].mxu0
    %v588 = vadd.f32 0.0, %v587
    %v589 = vpop.f32.mrb[0].mxu0
    %v590 = vadd.f32 0.0, %v589
    %591 = vdwg.mxu0
    %v592 = vadd.f32 %v446, %v517
    %v593 = vadd.f32 %v447, %v519
    %v594 = vadd.f32 %v448, %v588
    %v595 = vadd.f32 %v449, %v590
    %v596 = vxor.u32 %v592, 2147483648
    %v597 = vmul.f32 %v596, 1.442695
    %v598 = vpow.pop %v597
    %v599 = vadd.f32 %v598, 1.0
    %v600 = vrcp.pop %v599
    %v601 = vmul.f32 1.0, %v600
    %v602 = vxor.u32 %v593, 2147483648
    %v603 = vmul.f32 %v602, 1.442695
    %v604 = vpow.pop %v603
    %v605 = vadd.f32 %v604, 1.0
    %v606 = vrcp.pop %v605
    %v607 = vmul.f32 1.0, %v606
    %v608 = vtanh.pop %v594
    %v609 = vxor.u32 %v595, 2147483648
    %v610 = vmul.f32 %v609, 1.442695
    %v611 = vpow.pop %v610
    %v612 = vadd.f32 %v611, 1.0
    %v613 = vrcp.pop %v612
    %v614 = vmul.f32 1.0, %v613
    %v615 = vmul.f32 %v607, 0.0
    %v616 = vmul.f32 %v601, %v608
    %v617 = vadd.f32 %v615, %v616
    %v618 = vtanh.pop %v617
    %v619 = vmul.f32 %v614, %v618
    %s620 = smul.u32 1, 4
    %s621 = smul.addr %s620, 8
    %s622 = scalar_lea.vmem [#allocation2], %s621
    %v623 = vld [vmem:[%s622] sm:$0xff]
    %v624 = vld [vmem:[%s622 + $0x8] sm:$0xff]
    %v625 = vld [vmem:[%s622 + $0x10] sm:$0xff]
    %v626 = vld [vmem:[%s622 + $0x18] sm:$0xff]
    %627 = vmatprep.subr.mxu0 %v380
    %628 = vmatpush1.msra.mxu0 %v379
    %629 = vmatprep.subr.mxu0 %v384
    %630 = vmatpush1.msra.mxu0 %v383
    %631 = vmatprep.subr.mxu0 %v388
    %632 = vmatpush1.msra.mxu0 %v387
    %633 = vmatprep.subr.mxu0 %v392
    %634 = vmatpush1.msra.mxu0 %v391
    %635 = vmatprep.subr.mxu0 %v396
    %636 = vmatpush1.msra.mxu0 %v395
    %637 = vmatprep.subr.mxu0 %v400
    %638 = vmatpush1.msra.mxu0 %v399
    %639 = vmatprep.subr.mxu0 %v404
    %640 = vmatpush1.msra.mxu0 %v403
    %641 = vmatprep.subr.mxu0 %v408
    %642 = vmatpush1.msra.mxu0 %v407
    %643 = vmatprep.subr.mxu0 %v412
    %644 = vmatpush1.msra.mxu0 %v411
    %645 = vmatprep.subr.mxu0 %v416
    %646 = vmatpush1.msra.mxu0 %v415
    %647 = vmatprep.subr.mxu0 %v420
    %648 = vmatpush1.msra.mxu0 %v419
    %649 = vmatprep.subr.mxu0 %v424
    %650 = vmatpush1.msra.mxu0 %v423
    %651 = vmatprep.subr.mxu0 %v428
    %652 = vmatpush1.msra.mxu0 %v427
    %653 = vmatprep.subr.mxu0 %v432
    %654 = vmatpush1.msra.mxu0 %v431
    %655 = vmatprep.subr.mxu0 %v436
    %656 = vmatpush1.msra.mxu0 %v435
    %657 = vmatprep.subr.mxu0 %v440
    %658 = vmatpush1.msra.mxu0 %v439
    %659 = vmatprep.subr.mxu0 0.0
    %660 = vmatpush1.msra.mxu0 0.0
    %661 = vmatprep.subr.mxu0 0.0
    %662 = vmatpush1.msra.mxu0 0.0
    %663 = vmatprep.subr.mxu0 0.0
    %664 = vmatpush1.msra.mxu0 0.0
    %665 = vmatprep.subr.mxu0 0.0
    %666 = vmatpush1.msra.mxu0 0.0
    %667 = vmatprep.subr.mxu0 0.0
    %668 = vmatpush1.msra.mxu0 0.0
    %669 = vmatprep.subr.mxu0 0.0
    %670 = vmatpush1.msra.mxu0 0.0
    %671 = vmatprep.subr.mxu0 0.0
    %672 = vmatpush1.msra.mxu0 0.0
    %673 = vmatprep.subr.mxu0 0.0
    %674 = vmatpush1.msra.mxu0 0.0
    %675 = vmatprep.subr.mxu0 0.0
    %676 = vmatpush1.msra.mxu0 0.0
    %677 = vmatprep.subr.mxu0 0.0
    %678 = vmatpush1.msra.mxu0 0.0
    %679 = vmatprep.subr.mxu0 0.0
    %680 = vmatpush1.msra.mxu0 0.0
    %681 = vmatprep.subr.mxu0 0.0
    %682 = vmatpush1.msra.mxu0 0.0
    %683 = vmatprep.subr.mxu0 0.0
    %684 = vmatpush1.msra.mxu0 0.0
    %685 = vmatprep.subr.mxu0 0.0
    %686 = vmatpush1.msra.mxu0 0.0
    %687 = vmatprep.subr.mxu0 0.0
    %688 = vmatpush1.msra.mxu0 0.0
    %689 = vmatprep.subr.mxu0 0.0
    %690 = vmatpush1.msra.mxu0 0.0
    %691 = vmatprep.mubr.f32.mxu0 0.0
    %692 = vmatmul.mubr.f32.gmra.mrb[0].mxu0 %v619
    %v693 = vpop.f32.mrb[0].mxu0
    %v694 = vadd.f32 0.0, %v693
    %v695 = vpop.f32.mrb[0].mxu0
    %v696 = vadd.f32 0.0, %v695
    %697 = vdwg.mxu0
    %698 = vmatprep.subr.mxu0 %v382
    %699 = vmatpush1.msra.mxu0 %v381
    %700 = vmatprep.subr.mxu0 %v386
    %701 = vmatpush1.msra.mxu0 %v385
    %702 = vmatprep.subr.mxu0 %v390
    %703 = vmatpush1.msra.mxu0 %v389
    %704 = vmatprep.subr.mxu0 %v394
    %705 = vmatpush1.msra.mxu0 %v393
    %706 = vmatprep.subr.mxu0 %v398
    %707 = vmatpush1.msra.mxu0 %v397
    %708 = vmatprep.subr.mxu0 %v402
    %709 = vmatpush1.msra.mxu0 %v401
    %710 = vmatprep.subr.mxu0 %v406
    %711 = vmatpush1.msra.mxu0 %v405
    %712 = vmatprep.subr.mxu0 %v410
    %713 = vmatpush1.msra.mxu0 %v409
    %714 = vmatprep.subr.mxu0 %v414
    %715 = vmatpush1.msra.mxu0 %v413
    %716 = vmatprep.subr.mxu0 %v418
    %717 = vmatpush1.msra.mxu0 %v417
    %718 = vmatprep.subr.mxu0 %v422
    %719 = vmatpush1.msra.mxu0 %v421
    %720 = vmatprep.subr.mxu0 %v426
    %721 = vmatpush1.msra.mxu0 %v425
    %722 = vmatprep.subr.mxu0 %v430
    %723 = vmatpush1.msra.mxu0 %v429
    %724 = vmatprep.subr.mxu0 %v434
    %725 = vmatpush1.msra.mxu0 %v433
    %726 = vmatprep.subr.mxu0 %v438
    %727 = vmatpush1.msra.mxu0 %v437
    %728 = vmatprep.subr.mxu0 %v442
    %729 = vmatpush1.msra.mxu0 %v441
    %730 = vmatprep.subr.mxu0 0.0
    %731 = vmatpush1.msra.mxu0 0.0
    %732 = vmatprep.subr.mxu0 0.0
    %733 = vmatpush1.msra.mxu0 0.0
    %734 = vmatprep.subr.mxu0 0.0
    %735 = vmatpush1.msra.mxu0 0.0
    %736 = vmatprep.subr.mxu0 0.0
    %737 = vmatpush1.msra.mxu0 0.0
    %738 = vmatprep.subr.mxu0 0.0
    %739 = vmatpush1.msra.mxu0 0.0
    %740 = vmatprep.subr.mxu0 0.0
    %741 = vmatpush1.msra.mxu0 0.0
    %742 = vmatprep.subr.mxu0 0.0
    %743 = vmatpush1.msra.mxu0 0.0
    %744 = vmatprep.subr.mxu0 0.0
    %745 = vmatpush1.msra.mxu0 0.0
    %746 = vmatprep.subr.mxu0 0.0
    %747 = vmatpush1.msra.mxu0 0.0
    %748 = vmatprep.subr.mxu0 0.0
    %749 = vmatpush1.msra.mxu0 0.0
    %750 = vmatprep.subr.mxu0 0.0
    %751 = vmatpush1.msra.mxu0 0.0
    %752 = vmatprep.subr.mxu0 0.0
    %753 = vmatpush1.msra.mxu0 0.0
    %754 = vmatprep.subr.mxu0 0.0
    %755 = vmatpush1.msra.mxu0 0.0
    %756 = vmatprep.subr.mxu0 0.0
    %757 = vmatpush1.msra.mxu0 0.0
    %758 = vmatprep.subr.mxu0 0.0
    %759 = vmatpush1.msra.mxu0 0.0
    %760 = vmatprep.subr.mxu0 0.0
    %761 = vmatpush1.msra.mxu0 0.0
    %762 = vmatprep.mubr.f32.mxu0 0.0
    %763 = vmatmul.mubr.f32.gmra.mrb[0].mxu0 %v619
    %v764 = vpop.f32.mrb[0].mxu0
    %v765 = vadd.f32 0.0, %v764
    %v766 = vpop.f32.mrb[0].mxu0
    %v767 = vadd.f32 0.0, %v766
    %768 = vdwg.mxu0
    %v769 = vadd.f32 %v623, %v694
    %v770 = vadd.f32 %v624, %v696
    %v771 = vadd.f32 %v625, %v765
    %v772 = vadd.f32 %v626, %v767
    %v773 = vxor.u32 %v769, 2147483648
    %v774 = vmul.f32 %v773, 1.442695
    %v775 = vpow.pop %v774
    %v776 = vadd.f32 %v775, 1.0
    %v777 = vrcp.pop %v776
    %v778 = vmul.f32 1.0, %v777
    %v779 = vxor.u32 %v770, 2147483648
    %v780 = vmul.f32 %v779, 1.442695
    %v781 = vpow.pop %v780
    %v782 = vadd.f32 %v781, 1.0
    %v783 = vrcp.pop %v782
    %v784 = vmul.f32 1.0, %v783
    %v785 = vtanh.pop %v771
    %v786 = vxor.u32 %v772, 2147483648
    %v787 = vmul.f32 %v786, 1.442695
    %v788 = vpow.pop %v787
    %v789 = vadd.f32 %v788, 1.0
    %v790 = vrcp.pop %v789
    %v791 = vmul.f32 1.0, %v790
    %v792 = vmul.f32 %v784, %v617
    %v793 = vmul.f32 %v778, %v785
    %v794 = vadd.f32 %v792, %v793
    %v795 = vtanh.pop %v794
    %v796 = vmul.f32 %v791, %v795
    %s797 = smul.u32 2, 4
    %s798 = smul.addr %s797, 8
    %s799 = scalar_lea.vmem [#allocation2], %s798
    %v800 = vld [vmem:[%s799] sm:$0xff]
    %v801 = vld [vmem:[%s799 + $0x8] sm:$0xff]
    %v802 = vld [vmem:[%s799 + $0x10] sm:$0xff]
    %v803 = vld [vmem:[%s799 + $0x18] sm:$0xff]
    %804 = vmatprep.subr.mxu0 %v380
    %805 = vmatpush1.msra.mxu0 %v379
    %806 = vmatprep.subr.mxu0 %v384
    %807 = vmatpush1.msra.mxu0 %v383
    %808 = vmatprep.subr.mxu0 %v388
    %809 = vmatpush1.msra.mxu0 %v387
    %810 = vmatprep.subr.mxu0 %v392
    %811 = vmatpush1.msra.mxu0 %v391
    %812 = vmatprep.subr.mxu0 %v396
    %813 = vmatpush1.msra.mxu0 %v395
    %814 = vmatprep.subr.mxu0 %v400
    %815 = vmatpush1.msra.mxu0 %v399
    %816 = vmatprep.subr.mxu0 %v404
    %817 = vmatpush1.msra.mxu0 %v403
    %818 = vmatprep.subr.mxu0 %v408
    %819 = vmatpush1.msra.mxu0 %v407
    %820 = vmatprep.subr.mxu0 %v412
    %821 = vmatpush1.msra.mxu0 %v411
    %822 = vmatprep.subr.mxu0 %v416
    %823 = vmatpush1.msra.mxu0 %v415
    %824 = vmatprep.subr.mxu0 %v420
    %825 = vmatpush1.msra.mxu0 %v419
    %826 = vmatprep.subr.mxu0 %v424
    %827 = vmatpush1.msra.mxu0 %v423
    %828 = vmatprep.subr.mxu0 %v428
    %829 = vmatpush1.msra.mxu0 %v427
    %830 = vmatprep.subr.mxu0 %v432
    %831 = vmatpush1.msra.mxu0 %v431
    %832 = vmatprep.subr.mxu0 %v436
    %833 = vmatpush1.msra.mxu0 %v435
    %834 = vmatprep.subr.mxu0 %v440
    %835 = vmatpush1.msra.mxu0 %v439
    %836 = vmatprep.subr.mxu0 0.0
    %837 = vmatpush1.msra.mxu0 0.0
    %838 = vmatprep.subr.mxu0 0.0
    %839 = vmatpush1.msra.mxu0 0.0
    %840 = vmatprep.subr.mxu0 0.0
    %841 = vmatpush1.msra.mxu0 0.0
    %842 = vmatprep.subr.mxu0 0.0
    %843 = vmatpush1.msra.mxu0 0.0
    %844 = vmatprep.subr.mxu0 0.0
    %845 = vmatpush1.msra.mxu0 0.0
    %846 = vmatprep.subr.mxu0 0.0
    %847 = vmatpush1.msra.mxu0 0.0
    %848 = vmatprep.subr.mxu0 0.0
    %849 = vmatpush1.msra.mxu0 0.0
    %850 = vmatprep.subr.mxu0 0.0
    %851 = vmatpush1.msra.mxu0 0.0
    %852 = vmatprep.subr.mxu0 0.0
    %853 = vmatpush1.msra.mxu0 0.0
    %854 = vmatprep.subr.mxu0 0.0
    %855 = vmatpush1.msra.mxu0 0.0
    %856 = vmatprep.subr.mxu0 0.0
    %857 = vmatpush1.msra.mxu0 0.0
    %858 = vmatprep.subr.mxu0 0.0
    %859 = vmatpush1.msra.mxu0 0.0
    %860 = vmatprep.subr.mxu0 0.0
    %861 = vmatpush1.msra.mxu0 0.0
    %862 = vmatprep.subr.mxu0 0.0
    %863 = vmatpush1.msra.mxu0 0.0
    %864 = vmatprep.subr.mxu0 0.0
    %865 = vmatpush1.msra.mxu0 0.0
    %866 = vmatprep.subr.mxu0 0.0
    %867 = vmatpush1.msra.mxu0 0.0
    %868 = vmatprep.mubr.f32.mxu0 0.0
    %869 = vmatmul.mubr.f32.gmra.mrb[0].mxu0 %v796
    %v870 = vpop.f32.mrb[0].mxu0
    %v871 = vadd.f32 0.0, %v870
    %v872 = vpop.f32.mrb[0].mxu0
    %v873 = vadd.f32 0.0, %v872
    %874 = vdwg.mxu0
    %875 = vmatprep.subr.mxu0 %v382
    %876 = vmatpush1.msra.mxu0 %v381
    %877 = vmatprep.subr.mxu0 %v386
    %878 = vmatpush1.msra.mxu0 %v385
    %879 = vmatprep.subr.mxu0 %v390
    %880 = vmatpush1.msra.mxu0 %v389
    %881 = vmatprep.subr.mxu0 %v394
    %882 = vmatpush1.msra.mxu0 %v393
    %883 = vmatprep.subr.mxu0 %v398
    %884 = vmatpush1.msra.mxu0 %v397
    %885 = vmatprep.subr.mxu0 %v402
    %886 = vmatpush1.msra.mxu0 %v401
    %887 = vmatprep.subr.mxu0 %v406
    %888 = vmatpush1.msra.mxu0 %v405
    %889 = vmatprep.subr.mxu0 %v410
    %890 = vmatpush1.msra.mxu0 %v409
    %891 = vmatprep.subr.mxu0 %v414
    %892 = vmatpush1.msra.mxu0 %v413
    %893 = vmatprep.subr.mxu0 %v418
    %894 = vmatpush1.msra.mxu0 %v417
    %895 = vmatprep.subr.mxu0 %v422
    %896 = vmatpush1.msra.mxu0 %v421
    %897 = vmatprep.subr.mxu0 %v426
    %898 = vmatpush1.msra.mxu0 %v425
    %899 = vmatprep.subr.mxu0 %v430
    %900 = vmatpush1.msra.mxu0 %v429
    %901 = vmatprep.subr.mxu0 %v434
    %902 = vmatpush1.msra.mxu0 %v433
    %903 = vmatprep.subr.mxu0 %v438
    %904 = vmatpush1.msra.mxu0 %v437
    %905 = vmatprep.subr.mxu0 %v442
    %906 = vmatpush1.msra.mxu0 %v441
    %907 = vmatprep.subr.mxu0 0.0
    %908 = vmatpush1.msra.mxu0 0.0
    %909 = vmatprep.subr.mxu0 0.0
    %910 = vmatpush1.msra.mxu0 0.0
    %911 = vmatprep.subr.mxu0 0.0
    %912 = vmatpush1.msra.mxu0 0.0
    %913 = vmatprep.subr.mxu0 0.0
    %914 = vmatpush1.msra.mxu0 0.0
    %915 = vmatprep.subr.mxu0 0.0
    %916 = vmatpush1.msra.mxu0 0.0
    %917 = vmatprep.subr.mxu0 0.0
    %918 = vmatpush1.msra.mxu0 0.0
    %919 = vmatprep.subr.mxu0 0.0
    %920 = vmatpush1.msra.mxu0 0.0
    %921 = vmatprep.subr.mxu0 0.0
    %922 = vmatpush1.msra.mxu0 0.0
    %923 = vmatprep.subr.mxu0 0.0
    %924 = vmatpush1.msra.mxu0 0.0
    %925 = vmatprep.subr.mxu0 0.0
    %926 = vmatpush1.msra.mxu0 0.0
    %927 = vmatprep.subr.mxu0 0.0
    %928 = vmatpush1.msra.mxu0 0.0
    %929 = vmatprep.subr.mxu0 0.0
    %930 = vmatpush1.msra.mxu0 0.0
    %931 = vmatprep.subr.mxu0 0.0
    %932 = vmatpush1.msra.mxu0 0.0
    %933 = vmatprep.subr.mxu0 0.0
    %934 = vmatpush1.msra.mxu0 0.0
    %935 = vmatprep.subr.mxu0 0.0
    %936 = vmatpush1.msra.mxu0 0.0
    %937 = vmatprep.subr.mxu0 0.0
    %938 = vmatpush1.msra.mxu0 0.0
    %939 = vmatprep.mubr.f32.mxu0 0.0
    %940 = vmatmul.mubr.f32.gmra.mrb[0].mxu0 %v796
    %v941 = vpop.f32.mrb[0].mxu0
    %v942 = vadd.f32 0.0, %v941
    %v943 = vpop.f32.mrb[0].mxu0
    %v944 = vadd.f32 0.0, %v943
    %945 = vdwg.mxu0
    %v946 = vadd.f32 %v800, %v871
    %v947 = vadd.f32 %v801, %v873
    %v948 = vadd.f32 %v802, %v942
    %v949 = vadd.f32 %v803, %v944
    %v950 = vxor.u32 %v946, 2147483648
    %v951 = vmul.f32 %v950, 1.442695
    %v952 = vpow.pop %v951
    %v953 = vadd.f32 %v952, 1.0
    %v954 = vrcp.pop %v953
    %v955 = vmul.f32 1.0, %v954
    %v956 = vxor.u32 %v947, 2147483648
    %v957 = vmul.f32 %v956, 1.442695
    %v958 = vpow.pop %v957
    %v959 = vadd.f32 %v958, 1.0
    %v960 = vrcp.pop %v959
    %v961 = vmul.f32 1.0, %v960
    %v962 = vtanh.pop %v948
    %v963 = vxor.u32 %v949, 2147483648
    %v964 = vmul.f32 %v963, 1.442695
    %v965 = vpow.pop %v964
    %v966 = vadd.f32 %v965, 1.0
    %v967 = vrcp.pop %v966
    %v968 = vmul.f32 1.0, %v967
    %v969 = vmul.f32 %v961, %v794
    %v970 = vmul.f32 %v955, %v962
    %v971 = vadd.f32 %v969, %v970
    %v972 = vtanh.pop %v971
    %v973 = vmul.f32 %v968, %v972
    %s974 = smul.u32 3, 4
    %s975 = smul.addr %s974, 8
    %s976 = scalar_lea.vmem [#allocation2], %s975
    %v977 = vld [vmem:[%s976] sm:$0xff]
    %v978 = vld [vmem:[%s976 + $0x8] sm:$0xff]
    %v979 = vld [vmem:[%s976 + $0x10] sm:$0xff]
    %v980 = vld [vmem:[%s976 + $0x18] sm:$0xff]
    %981 = vmatprep.subr.mxu0 %v380
    %982 = vmatpush1.msra.mxu0 %v379
    %983 = vmatprep.subr.mxu0 %v384
    %984 = vmatpush1.msra.mxu0 %v383
    %985 = vmatprep.subr.mxu0 %v388
    %986 = vmatpush1.msra.mxu0 %v387
    %987 = vmatprep.subr.mxu0 %v392
    %988 = vmatpush1.msra.mxu0 %v391
    %989 = vmatprep.subr.mxu0 %v396
    %990 = vmatpush1.msra.mxu0 %v395
    %991 = vmatprep.subr.mxu0 %v400
    %992 = vmatpush1.msra.mxu0 %v399
    %993 = vmatprep.subr.mxu0 %v404
    %994 = vmatpush1.msra.mxu0 %v403
    %995 = vmatprep.subr.mxu0 %v408
    %996 = vmatpush1.msra.mxu0 %v407
    %997 = vmatprep.subr.mxu0 %v412
    %998 = vmatpush1.msra.mxu0 %v411
    %999 = vmatprep.subr.mxu0 %v416
    %1000 = vmatpush1.msra.mxu0 %v415
    %1001 = vmatprep.subr.mxu0 %v420
    %1002 = vmatpush1.msra.mxu0 %v419
    %1003 = vmatprep.subr.mxu0 %v424
    %1004 = vmatpush1.msra.mxu0 %v423
    %1005 = vmatprep.subr.mxu0 %v428
    %1006 = vmatpush1.msra.mxu0 %v427
    %1007 = vmatprep.subr.mxu0 %v432
    %1008 = vmatpush1.msra.mxu0 %v431
    %1009 = vmatprep.subr.mxu0 %v436
    %1010 = vmatpush1.msra.mxu0 %v435
    %1011 = vmatprep.subr.mxu0 %v440
    %1012 = vmatpush1.msra.mxu0 %v439
    %1013 = vmatprep.subr.mxu0 0.0
    %1014 = vmatpush1.msra.mxu0 0.0
    %1015 = vmatprep.subr.mxu0 0.0
    %1016 = vmatpush1.msra.mxu0 0.0
    %1017 = vmatprep.subr.mxu0 0.0
    %1018 = vmatpush1.msra.mxu0 0.0
    %1019 = vmatprep.subr.mxu0 0.0
    %1020 = vmatpush1.msra.mxu0 0.0
    %1021 = vmatprep.subr.mxu0 0.0
    %1022 = vmatpush1.msra.mxu0 0.0
    %1023 = vmatprep.subr.mxu0 0.0
    %1024 = vmatpush1.msra.mxu0 0.0
    %1025 = vmatprep.subr.mxu0 0.0
    %1026 = vmatpush1.msra.mxu0 0.0
    %1027 = vmatprep.subr.mxu0 0.0
    %1028 = vmatpush1.msra.mxu0 0.0
    %1029 = vmatprep.subr.mxu0 0.0
    %1030 = vmatpush1.msra.mxu0 0.0
    %1031 = vmatprep.subr.mxu0 0.0
    %1032 = vmatpush1.msra.mxu0 0.0
    %1033 = vmatprep.subr.mxu0 0.0
    %1034 = vmatpush1.msra.mxu0 0.0
    %1035 = vmatprep.subr.mxu0 0.0
    %1036 = vmatpush1.msra.mxu0 0.0
    %1037 = vmatprep.subr.mxu0 0.0
    %1038 = vmatpush1.msra.mxu0 0.0
    %1039 = vmatprep.subr.mxu0 0.0
    %1040 = vmatpush1.msra.mxu0 0.0
    %1041 = vmatprep.subr.mxu0 0.0
    %1042 = vmatpush1.msra.mxu0 0.0
    %1043 = vmatprep.subr.mxu0 0.0
    %1044 = vmatpush1.msra.mxu0 0.0
    %1045 = vmatprep.mubr.f32.mxu0 0.0
    %1046 = vmatmul.mubr.f32.gmra.mrb[0].mxu0 %v973
    %v1047 = vpop.f32.mrb[0].mxu0
    %v1048 = vadd.f32 0.0, %v1047
    %v1049 = vpop.f32.mrb[0].mxu0
    %v1050 = vadd.f32 0.0, %v1049
    %1051 = vdwg.mxu0
    %1052 = vmatprep.subr.mxu0 %v382
    %1053 = vmatpush1.msra.mxu0 %v381
    %1054 = vmatprep.subr.mxu0 %v386
    %1055 = vmatpush1.msra.mxu0 %v385
    %1056 = vmatprep.subr.mxu0 %v390
    %1057 = vmatpush1.msra.mxu0 %v389
    %1058 = vmatprep.subr.mxu0 %v394
    %1059 = vmatpush1.msra.mxu0 %v393
    %1060 = vmatprep.subr.mxu0 %v398
    %1061 = vmatpush1.msra.mxu0 %v397
    %1062 = vmatprep.subr.mxu0 %v402
    %1063 = vmatpush1.msra.mxu0 %v401
    %1064 = vmatprep.subr.mxu0 %v406
    %1065 = vmatpush1.msra.mxu0 %v405
    %1066 = vmatprep.subr.mxu0 %v410
    %1067 = vmatpush1.msra.mxu0 %v409
    %1068 = vmatprep.subr.mxu0 %v414
    %1069 = vmatpush1.msra.mxu0 %v413
    %1070 = vmatprep.subr.mxu0 %v418
    %1071 = vmatpush1.msra.mxu0 %v417
    %1072 = vmatprep.subr.mxu0 %v422
    %1073 = vmatpush1.msra.mxu0 %v421
    %1074 = vmatprep.subr.mxu0 %v426
    %1075 = vmatpush1.msra.mxu0 %v425
    %1076 = vmatprep.subr.mxu0 %v430
    %1077 = vmatpush1.msra.mxu0 %v429
    %1078 = vmatprep.subr.mxu0 %v434
    %1079 = vmatpush1.msra.mxu0 %v433
    %1080 = vmatprep.subr.mxu0 %v438
    %1081 = vmatpush1.msra.mxu0 %v437
    %1082 = vmatprep.subr.mxu0 %v442
    %1083 = vmatpush1.msra.mxu0 %v441
    %1084 = vmatprep.subr.mxu0 0.0
    %1085 = vmatpush1.msra.mxu0 0.0
    %1086 = vmatprep.subr.mxu0 0.0
    %1087 = vmatpush1.msra.mxu0 0.0
    %1088 = vmatprep.subr.mxu0 0.0
    %1089 = vmatpush1.msra.mxu0 0.0
    %1090 = vmatprep.subr.mxu0 0.0
    %1091 = vmatpush1.msra.mxu0 0.0
    %1092 = vmatprep.subr.mxu0 0.0
    %1093 = vmatpush1.msra.mxu0 0.0
    %1094 = vmatprep.subr.mxu0 0.0
    %1095 = vmatpush1.msra.mxu0 0.0
    %1096 = vmatprep.subr.mxu0 0.0
    %1097 = vmatpush1.msra.mxu0 0.0
    %1098 = vmatprep.subr.mxu0 0.0
    %1099 = vmatpush1.msra.mxu0 0.0
    %1100 = vmatprep.subr.mxu0 0.0
    %1101 = vmatpush1.msra.mxu0 0.0
    %1102 = vmatprep.subr.mxu0 0.0
    %1103 = vmatpush1.msra.mxu0 0.0
    %1104 = vmatprep.subr.mxu0 0.0
    %1105 = vmatpush1.msra.mxu0 0.0
    %1106 = vmatprep.subr.mxu0 0.0
    %1107 = vmatpush1.msra.mxu0 0.0
    %1108 = vmatprep.subr.mxu0 0.0
    %1109 = vmatpush1.msra.mxu0 0.0
    %1110 = vmatprep.subr.mxu0 0.0
    %1111 = vmatpush1.msra.mxu0 0.0
    %1112 = vmatprep.subr.mxu0 0.0
    %1113 = vmatpush1.msra.mxu0 0.0
    %1114 = vmatprep.subr.mxu0 0.0
    %1115 = vmatpush1.msra.mxu0 0.0
    %1116 = vmatprep.mubr.f32.mxu0 0.0
    %1117 = vmatmul.mubr.f32.gmra.mrb[0].mxu0 %v973
    %v1118 = vpop.f32.mrb[0].mxu0
    %v1119 = vadd.f32 0.0, %v1118
    %v1120 = vpop.f32.mrb[0].mxu0
    %v1121 = vadd.f32 0.0, %v1120
    %1122 = vdwg.mxu0
    %v1123 = vadd.f32 %v977, %v1048
    %v1124 = vadd.f32 %v978, %v1050
    %v1125 = vadd.f32 %v979, %v1119
    %v1126 = vadd.f32 %v980, %v1121
    %v1127 = vxor.u32 %v1123, 2147483648
    %v1128 = vmul.f32 %v1127, 1.442695
    %v1129 = vpow.pop %v1128
    %v1130 = vadd.f32 %v1129, 1.0
    %v1131 = vrcp.pop %v1130
    %v1132 = vmul.f32 1.0, %v1131
    %v1133 = vxor.u32 %v1124, 2147483648
    %v1134 = vmul.f32 %v1133, 1.442695
    %v1135 = vpow.pop %v1134
    %v1136 = vadd.f32 %v1135, 1.0
    %v1137 = vrcp.pop %v1136
    %v1138 = vmul.f32 1.0, %v1137
    %v1139 = vtanh.pop %v1125
    %v1140 = vxor.u32 %v1126, 2147483648
    %v1141 = vmul.f32 %v1140, 1.442695
    %v1142 = vpow.pop %v1141
    %v1143 = vadd.f32 %v1142, 1.0
    %v1144 = vrcp.pop %v1143
    %v1145 = vmul.f32 1.0, %v1144
    %v1146 = vmul.f32 %v1138, %v971
    %v1147 = vmul.f32 %v1132, %v1139
    %v1148 = vadd.f32 %v1146, %v1147
    %v1149 = vtanh.pop %v1148
    %v1150 = vmul.f32 %v1145, %v1149
    %s1151 = smul.u32 4, 4
    %s1152 = smul.addr %s1151, 8
    %s1153 = scalar_lea.vmem [#allocation2], %s1152
    %v1154 = vld [vmem:[%s1153] sm:$0xff]
    %v1155 = vld [vmem:[%s1153 + $0x8] sm:$0xff]
    %v1156 = vld [vmem:[%s1153 + $0x10] sm:$0xff]
    %v1157 = vld [vmem:[%s1153 + $0x18] sm:$0xff]
    %1158 = vmatprep.subr.mxu0 %v380
    %1159 = vmatpush1.msra.mxu0 %v379
    %1160 = vmatprep.subr.mxu0 %v384
    %1161 = vmatpush1.msra.mxu0 %v383
    %1162 = vmatprep.subr.mxu0 %v388
    %1163 = vmatpush1.msra.mxu0 %v387
    %1164 = vmatprep.subr.mxu0 %v392
    %1165 = vmatpush1.msra.mxu0 %v391
    %1166 = vmatprep.subr.mxu0 %v396
    %1167 = vmatpush1.msra.mxu0 %v395
    %1168 = vmatprep.subr.mxu0 %v400
    %1169 = vmatpush1.msra.mxu0 %v399
    %1170 = vmatprep.subr.mxu0 %v404
    %1171 = vmatpush1.msra.mxu0 %v403
    %1172 = vmatprep.subr.mxu0 %v408
    %1173 = vmatpush1.msra.mxu0 %v407
    %1174 = vmatprep.subr.mxu0 %v412
    %1175 = vmatpush1.msra.mxu0 %v411
    %1176 = vmatprep.subr.mxu0 %v416
    %1177 = vmatpush1.msra.mxu0 %v415
    %1178 = vmatprep.subr.mxu0 %v420
    %1179 = vmatpush1.msra.mxu0 %v419
    %1180 = vmatprep.subr.mxu0 %v424
    %1181 = vmatpush1.msra.mxu0 %v423
    %1182 = vmatprep.subr.mxu0 %v428
    %1183 = vmatpush1.msra.mxu0 %v427
    %1184 = vmatprep.subr.mxu0 %v432
    %1185 = vmatpush1.msra.mxu0 %v431
    %1186 = vmatprep.subr.mxu0 %v436
    %1187 = vmatpush1.msra.mxu0 %v435
    %1188 = vmatprep.subr.mxu0 %v440
    %1189 = vmatpush1.msra.mxu0 %v439
    %1190 = vmatprep.subr.mxu0 0.0
    %1191 = vmatpush1.msra.mxu0 0.0
    %1192 = vmatprep.subr.mxu0 0.0
    %1193 = vmatpush1.msra.mxu0 0.0
    %1194 = vmatprep.subr.mxu0 0.0
    %1195 = vmatpush1.msra.mxu0 0.0
    %1196 = vmatprep.subr.mxu0 0.0
    %1197 = vmatpush1.msra.mxu0 0.0
    %1198 = vmatprep.subr.mxu0 0.0
    %1199 = vmatpush1.msra.mxu0 0.0
    %1200 = vmatprep.subr.mxu0 0.0
    %1201 = vmatpush1.msra.mxu0 0.0
    %1202 = vmatprep.subr.mxu0 0.0
    %1203 = vmatpush1.msra.mxu0 0.0
    %1204 = vmatprep.subr.mxu0 0.0
    %1205 = vmatpush1.msra.mxu0 0.0
    %1206 = vmatprep.subr.mxu0 0.0
    %1207 = vmatpush1.msra.mxu0 0.0
    %1208 = vmatprep.subr.mxu0 0.0
    %1209 = vmatpush1.msra.mxu0 0.0
    %1210 = vmatprep.subr.mxu0 0.0
    %1211 = vmatpush1.msra.mxu0 0.0
    %1212 = vmatprep.subr.mxu0 0.0
    %1213 = vmatpush1.msra.mxu0 0.0
    %1214 = vmatprep.subr.mxu0 0.0
    %1215 = vmatpush1.msra.mxu0 0.0
    %1216 = vmatprep.subr.mxu0 0.0
    %1217 = vmatpush1.msra.mxu0 0.0
    %1218 = vmatprep.subr.mxu0 0.0
    %1219 = vmatpush1.msra.mxu0 0.0
    %1220 = vmatprep.subr.mxu0 0.0
    %1221 = vmatpush1.msra.mxu0 0.0
    %1222 = vmatprep.mubr.f32.mxu0 0.0
    %1223 = vmatmul.mubr.f32.gmra.mrb[0].mxu0 %v1150
    %v1224 = vpop.f32.mrb[0].mxu0
    %v1225 = vadd.f32 0.0, %v1224
    %v1226 = vpop.f32.mrb[0].mxu0
    %v1227 = vadd.f32 0.0, %v1226
    %1228 = vdwg.mxu0
    %1229 = vmatprep.subr.mxu0 %v382
    %1230 = vmatpush1.msra.mxu0 %v381
    %1231 = vmatprep.subr.mxu0 %v386
    %1232 = vmatpush1.msra.mxu0 %v385
    %1233 = vmatprep.subr.mxu0 %v390
    %1234 = vmatpush1.msra.mxu0 %v389
    %1235 = vmatprep.subr.mxu0 %v394
    %1236 = vmatpush1.msra.mxu0 %v393
    %1237 = vmatprep.subr.mxu0 %v398
    %1238 = vmatpush1.msra.mxu0 %v397
    %1239 = vmatprep.subr.mxu0 %v402
    %1240 = vmatpush1.msra.mxu0 %v401
    %1241 = vmatprep.subr.mxu0 %v406
    %1242 = vmatpush1.msra.mxu0 %v405
    %1243 = vmatprep.subr.mxu0 %v410
    %1244 = vmatpush1.msra.mxu0 %v409
    %1245 = vmatprep.subr.mxu0 %v414
    %1246 = vmatpush1.msra.mxu0 %v413
    %1247 = vmatprep.subr.mxu0 %v418
    %1248 = vmatpush1.msra.mxu0 %v417
    %1249 = vmatprep.subr.mxu0 %v422
    %1250 = vmatpush1.msra.mxu0 %v421
    %1251 = vmatprep.subr.mxu0 %v426
    %1252 = vmatpush1.msra.mxu0 %v425
    %1253 = vmatprep.subr.mxu0 %v430
    %1254 = vmatpush1.msra.mxu0 %v429
    %1255 = vmatprep.subr.mxu0 %v434
    %1256 = vmatpush1.msra.mxu0 %v433
    %1257 = vmatprep.subr.mxu0 %v438
    %1258 = vmatpush1.msra.mxu0 %v437
    %1259 = vmatprep.subr.mxu0 %v442
    %1260 = vmatpush1.msra.mxu0 %v441
    %1261 = vmatprep.subr.mxu0 0.0
    %1262 = vmatpush1.msra.mxu0 0.0
    %1263 = vmatprep.subr.mxu0 0.0
    %1264 = vmatpush1.msra.mxu0 0.0
    %1265 = vmatprep.subr.mxu0 0.0
    %1266 = vmatpush1.msra.mxu0 0.0
    %1267 = vmatprep.subr.mxu0 0.0
    %1268 = vmatpush1.msra.mxu0 0.0
    %1269 = vmatprep.subr.mxu0 0.0
    %1270 = vmatpush1.msra.mxu0 0.0
    %1271 = vmatprep.subr.mxu0 0.0
    %1272 = vmatpush1.msra.mxu0 0.0
    %1273 = vmatprep.subr.mxu0 0.0
    %1274 = vmatpush1.msra.mxu0 0.0
    %1275 = vmatprep.subr.mxu0 0.0
    %1276 = vmatpush1.msra.mxu0 0.0
    %1277 = vmatprep.subr.mxu0 0.0
    %1278 = vmatpush1.msra.mxu0 0.0
    %1279 = vmatprep.subr.mxu0 0.0
    %1280 = vmatpush1.msra.mxu0 0.0
    %1281 = vmatprep.subr.mxu0 0.0
    %1282 = vmatpush1.msra.mxu0 0.0
    %1283 = vmatprep.subr.mxu0 0.0
    %1284 = vmatpush1.msra.mxu0 0.0
    %1285 = vmatprep.subr.mxu0 0.0
    %1286 = vmatpush1.msra.mxu0 0.0
    %1287 = vmatprep.subr.mxu0 0.0
    %1288 = vmatpush1.msra.mxu0 0.0
    %1289 = vmatprep.subr.mxu0 0.0
    %1290 = vmatpush1.msra.mxu0 0.0
    %1291 = vmatprep.subr.mxu0 0.0
    %1292 = vmatpush1.msra.mxu0 0.0
    %1293 = vmatprep.mubr.f32.mxu0 0.0
    %1294 = vmatmul.mubr.f32.gmra.mrb[0].mxu0 %v1150
    %v1295 = vpop.f32.mrb[0].mxu0
    %v1296 = vadd.f32 0.0, %v1295
    %v1297 = vpop.f32.mrb[0].mxu0
    %v1298 = vadd.f32 0.0, %v1297
    %1299 = vdwg.mxu0
    %v1300 = vadd.f32 %v1154, %v1225
    %v1301 = vadd.f32 %v1155, %v1227
    %v1302 = vadd.f32 %v1156, %v1296
    %v1303 = vadd.f32 %v1157, %v1298
    %v1304 = vxor.u32 %v1300, 2147483648
    %v1305 = vmul.f32 %v1304, 1.442695
    %v1306 = vpow.pop %v1305
    %v1307 = vadd.f32 %v1306, 1.0
    %v1308 = vrcp.pop %v1307
    %v1309 = vmul.f32 1.0, %v1308
    %v1310 = vxor.u32 %v1301, 2147483648
    %v1311 = vmul.f32 %v1310, 1.442695
    %v1312 = vpow.pop %v1311
    %v1313 = vadd.f32 %v1312, 1.0
    %v1314 = vrcp.pop %v1313
    %v1315 = vmul.f32 1.0, %v1314
    %v1316 = vtanh.pop %v1302
    %v1317 = vxor.u32 %v1303, 2147483648
    %v1318 = vmul.f32 %v1317, 1.442695
    %v1319 = vpow.pop %v1318
    %v1320 = vadd.f32 %v1319, 1.0
    %v1321 = vrcp.pop %v1320
    %v1322 = vmul.f32 1.0, %v1321
    %v1323 = vmul.f32 %v1315, %v1148
    %v1324 = vmul.f32 %v1309, %v1316
    %v1325 = vadd.f32 %v1323, %v1324
    %v1326 = vtanh.pop %v1325
    %v1327 = vmul.f32 %v1322, %v1326
    %s1328 = smul.u32 5, 4
    %s1329 = smul.addr %s1328, 8
    %s1330 = scalar_lea.vmem [#allocation2], %s1329
    %v1331 = vld [vmem:[%s1330] sm:$0xff]
    %v1332 = vld [vmem:[%s1330 + $0x8] sm:$0xff]
    %v1333 = vld [vmem:[%s1330 + $0x10] sm:$0xff]
    %v1334 = vld [vmem:[%s1330 + $0x18] sm:$0xff]
    %1335 = vmatprep.subr.mxu0 %v380
    %1336 = vmatpush1.msra.mxu0 %v379
    %1337 = vmatprep.subr.mxu0 %v384
    %1338 = vmatpush1.msra.mxu0 %v383
    %1339 = vmatprep.subr.mxu0 %v388
    %1340 = vmatpush1.msra.mxu0 %v387
    %1341 = vmatprep.subr.mxu0 %v392
    %1342 = vmatpush1.msra.mxu0 %v391
    %1343 = vmatprep.subr.mxu0 %v396
    %1344 = vmatpush1.msra.mxu0 %v395
    %1345 = vmatprep.subr.mxu0 %v400
    %1346 = vmatpush1.msra.mxu0 %v399
    %1347 = vmatprep.subr.mxu0 %v404
    %1348 = vmatpush1.msra.mxu0 %v403
    %1349 = vmatprep.subr.mxu0 %v408
    %1350 = vmatpush1.msra.mxu0 %v407
    %1351 = vmatprep.subr.mxu0 %v412
    %1352 = vmatpush1.msra.mxu0 %v411
    %1353 = vmatprep.subr.mxu0 %v416
    %1354 = vmatpush1.msra.mxu0 %v415
    %1355 = vmatprep.subr.mxu0 %v420
    %1356 = vmatpush1.msra.mxu0 %v419
    %1357 = vmatprep.subr.mxu0 %v424
    %1358 = vmatpush1.msra.mxu0 %v423
    %1359 = vmatprep.subr.mxu0 %v428
    %1360 = vmatpush1.msra.mxu0 %v427
    %1361 = vmatprep.subr.mxu0 %v432
    %1362 = vmatpush1.msra.mxu0 %v431
    %1363 = vmatprep.subr.mxu0 %v436
    %1364 = vmatpush1.msra.mxu0 %v435
    %1365 = vmatprep.subr.mxu0 %v440
    %1366 = vmatpush1.msra.mxu0 %v439
    %1367 = vmatprep.subr.mxu0 0.0
    %1368 = vmatpush1.msra.mxu0 0.0
    %1369 = vmatprep.subr.mxu0 0.0
    %1370 = vmatpush1.msra.mxu0 0.0
    %1371 = vmatprep.subr.mxu0 0.0
    %1372 = vmatpush1.msra.mxu0 0.0
    %1373 = vmatprep.subr.mxu0 0.0
    %1374 = vmatpush1.msra.mxu0 0.0
    %1375 = vmatprep.subr.mxu0 0.0
    %1376 = vmatpush1.msra.mxu0 0.0
    %1377 = vmatprep.subr.mxu0 0.0
    %1378 = vmatpush1.msra.mxu0 0.0
    %1379 = vmatprep.subr.mxu0 0.0
    %1380 = vmatpush1.msra.mxu0 0.0
    %1381 = vmatprep.subr.mxu0 0.0
    %1382 = vmatpush1.msra.mxu0 0.0
    %1383 = vmatprep.subr.mxu0 0.0
    %1384 = vmatpush1.msra.mxu0 0.0
    %1385 = vmatprep.subr.mxu0 0.0
    %1386 = vmatpush1.msra.mxu0 0.0
    %1387 = vmatprep.subr.mxu0 0.0
    %1388 = vmatpush1.msra.mxu0 0.0
    %1389 = vmatprep.subr.mxu0 0.0
    %1390 = vmatpush1.msra.mxu0 0.0
    %1391 = vmatprep.subr.mxu0 0.0
    %1392 = vmatpush1.msra.mxu0 0.0
    %1393 = vmatprep.subr.mxu0 0.0
    %1394 = vmatpush1.msra.mxu0 0.0
    %1395 = vmatprep.subr.mxu0 0.0
    %1396 = vmatpush1.msra.mxu0 0.0
    %1397 = vmatprep.subr.mxu0 0.0
    %1398 = vmatpush1.msra.mxu0 0.0
    %1399 = vmatprep.mubr.f32.mxu0 0.0
    %1400 = vmatmul.mubr.f32.gmra.mrb[0].mxu0 %v1327
    %v1401 = vpop.f32.mrb[0].mxu0
    %v1402 = vadd.f32 0.0, %v1401
    %v1403 = vpop.f32.mrb[0].mxu0
    %v1404 = vadd.f32 0.0, %v1403
    %1405 = vdwg.mxu0
    %1406 = vmatprep.subr.mxu0 %v382
    %1407 = vmatpush1.msra.mxu0 %v381
    %1408 = vmatprep.subr.mxu0 %v386
    %1409 = vmatpush1.msra.mxu0 %v385
    %1410 = vmatprep.subr.mxu0 %v390
    %1411 = vmatpush1.msra.mxu0 %v389
    %1412 = vmatprep.subr.mxu0 %v394
    %1413 = vmatpush1.msra.mxu0 %v393
    %1414 = vmatprep.subr.mxu0 %v398
    %1415 = vmatpush1.msra.mxu0 %v397
    %1416 = vmatprep.subr.mxu0 %v402
    %1417 = vmatpush1.msra.mxu0 %v401
    %1418 = vmatprep.subr.mxu0 %v406
    %1419 = vmatpush1.msra.mxu0 %v405
    %1420 = vmatprep.subr.mxu0 %v410
    %1421 = vmatpush1.msra.mxu0 %v409
    %1422 = vmatprep.subr.mxu0 %v414
    %1423 = vmatpush1.msra.mxu0 %v413
    %1424 = vmatprep.subr.mxu0 %v418
    %1425 = vmatpush1.msra.mxu0 %v417
    %1426 = vmatprep.subr.mxu0 %v422
    %1427 = vmatpush1.msra.mxu0 %v421
    %1428 = vmatprep.subr.mxu0 %v426
    %1429 = vmatpush1.msra.mxu0 %v425
    %1430 = vmatprep.subr.mxu0 %v430
    %1431 = vmatpush1.msra.mxu0 %v429
    %1432 = vmatprep.subr.mxu0 %v434
    %1433 = vmatpush1.msra.mxu0 %v433
    %1434 = vmatprep.subr.mxu0 %v438
    %1435 = vmatpush1.msra.mxu0 %v437
    %1436 = vmatprep.subr.mxu0 %v442
    %1437 = vmatpush1.msra.mxu0 %v441
    %1438 = vmatprep.subr.mxu0 0.0
    %1439 = vmatpush1.msra.mxu0 0.0
    %1440 = vmatprep.subr.mxu0 0.0
    %1441 = vmatpush1.msra.mxu0 0.0
    %1442 = vmatprep.subr.mxu0 0.0
    %1443 = vmatpush1.msra.mxu0 0.0
    %1444 = vmatprep.subr.mxu0 0.0
    %1445 = vmatpush1.msra.mxu0 0.0
    %1446 = vmatprep.subr.mxu0 0.0
    %1447 = vmatpush1.msra.mxu0 0.0
    %1448 = vmatprep.subr.mxu0 0.0
    %1449 = vmatpush1.msra.mxu0 0.0
    %1450 = vmatprep.subr.mxu0 0.0
    %1451 = vmatpush1.msra.mxu0 0.0
    %1452 = vmatprep.subr.mxu0 0.0
    %1453 = vmatpush1.msra.mxu0 0.0
    %1454 = vmatprep.subr.mxu0 0.0
    %1455 = vmatpush1.msra.mxu0 0.0
    %1456 = vmatprep.subr.mxu0 0.0
    %1457 = vmatpush1.msra.mxu0 0.0
    %1458 = vmatprep.subr.mxu0 0.0
    %1459 = vmatpush1.msra.mxu0 0.0
    %1460 = vmatprep.subr.mxu0 0.0
    %1461 = vmatpush1.msra.mxu0 0.0
    %1462 = vmatprep.subr.mxu0 0.0
    %1463 = vmatpush1.msra.mxu0 0.0
    %1464 = vmatprep.subr.mxu0 0.0
    %1465 = vmatpush1.msra.mxu0 0.0
    %1466 = vmatprep.subr.mxu0 0.0
    %1467 = vmatpush1.msra.mxu0 0.0
    %1468 = vmatprep.subr.mxu0 0.0
    %1469 = vmatpush1.msra.mxu0 0.0
    %1470 = vmatprep.mubr.f32.mxu0 0.0
    %1471 = vmatmul.mubr.f32.gmra.mrb[0].mxu0 %v1327
    %v1472 = vpop.f32.mrb[0].mxu0
    %v1473 = vadd.f32 0.0, %v1472
    %v1474 = vpop.f32.mrb[0].mxu0
    %v1475 = vadd.f32 0.0, %v1474
    %1476 = vdwg.mxu0
    %v1477 = vadd.f32 %v1331, %v1402
    %v1478 = vadd.f32 %v1332, %v1404
    %v1479 = vadd.f32 %v1333, %v1473
    %v1480 = vadd.f32 %v1334, %v1475
    %v1481 = vxor.u32 %v1477, 2147483648
    %v1482 = vmul.f32 %v1481, 1.442695
    %v1483 = vpow.pop %v1482
    %v1484 = vadd.f32 %v1483, 1.0
    %v1485 = vrcp.pop %v1484
    %v1486 = vmul.f32 1.0, %v1485
    %v1487 = vxor.u32 %v1478, 2147483648
    %v1488 = vmul.f32 %v1487, 1.442695
    %v1489 = vpow.pop %v1488
    %v1490 = vadd.f32 %v1489, 1.0
    %v1491 = vrcp.pop %v1490
    %v1492 = vmul.f32 1.0, %v1491
    %v1493 = vtanh.pop %v1479
    %v1494 = vxor.u32 %v1480, 2147483648
    %v1495 = vmul.f32 %v1494, 1.442695
    %v1496 = vpow.pop %v1495
    %v1497 = vadd.f32 %v1496, 1.0
    %v1498 = vrcp.pop %v1497
    %v1499 = vmul.f32 1.0, %v1498
    %v1500 = vmul.f32 %v1492, %v1325
    %v1501 = vmul.f32 %v1486, %v1493
    %v1502 = vadd.f32 %v1500, %v1501
    %v1503 = vtanh.pop %v1502
    %v1504 = vmul.f32 %v1499, %v1503
    %s1505 = smul.u32 6, 4
    %s1506 = smul.addr %s1505, 8
    %s1507 = scalar_lea.vmem [#allocation2], %s1506
    %v1508 = vld [vmem:[%s1507] sm:$0xff]
    %v1509 = vld [vmem:[%s1507 + $0x8] sm:$0xff]
    %v1510 = vld [vmem:[%s1507 + $0x10] sm:$0xff]
    %v1511 = vld [vmem:[%s1507 + $0x18] sm:$0xff]
    %1512 = vmatprep.subr.mxu0 %v380
    %1513 = vmatpush1.msra.mxu0 %v379
    %1514 = vmatprep.subr.mxu0 %v384
    %1515 = vmatpush1.msra.mxu0 %v383
    %1516 = vmatprep.subr.mxu0 %v388
    %1517 = vmatpush1.msra.mxu0 %v387
    %1518 = vmatprep.subr.mxu0 %v392
    %1519 = vmatpush1.msra.mxu0 %v391
    %1520 = vmatprep.subr.mxu0 %v396
    %1521 = vmatpush1.msra.mxu0 %v395
    %1522 = vmatprep.subr.mxu0 %v400
    %1523 = vmatpush1.msra.mxu0 %v399
    %1524 = vmatprep.subr.mxu0 %v404
    %1525 = vmatpush1.msra.mxu0 %v403
    %1526 = vmatprep.subr.mxu0 %v408
    %1527 = vmatpush1.msra.mxu0 %v407
    %1528 = vmatprep.subr.mxu0 %v412
    %1529 = vmatpush1.msra.mxu0 %v411
    %1530 = vmatprep.subr.mxu0 %v416
    %1531 = vmatpush1.msra.mxu0 %v415
    %1532 = vmatprep.subr.mxu0 %v420
    %1533 = vmatpush1.msra.mxu0 %v419
    %1534 = vmatprep.subr.mxu0 %v424
    %1535 = vmatpush1.msra.mxu0 %v423
    %1536 = vmatprep.subr.mxu0 %v428
    %1537 = vmatpush1.msra.mxu0 %v427
    %1538 = vmatprep.subr.mxu0 %v432
    %1539 = vmatpush1.msra.mxu0 %v431
    %1540 = vmatprep.subr.mxu0 %v436
    %1541 = vmatpush1.msra.mxu0 %v435
    %1542 = vmatprep.subr.mxu0 %v440
    %1543 = vmatpush1.msra.mxu0 %v439
    %1544 = vmatprep.subr.mxu0 0.0
    %1545 = vmatpush1.msra.mxu0 0.0
    %1546 = vmatprep.subr.mxu0 0.0
    %1547 = vmatpush1.msra.mxu0 0.0
    %1548 = vmatprep.subr.mxu0 0.0
    %1549 = vmatpush1.msra.mxu0 0.0
    %1550 = vmatprep.subr.mxu0 0.0
    %1551 = vmatpush1.msra.mxu0 0.0
    %1552 = vmatprep.subr.mxu0 0.0
    %1553 = vmatpush1.msra.mxu0 0.0
    %1554 = vmatprep.subr.mxu0 0.0
    %1555 = vmatpush1.msra.mxu0 0.0
    %1556 = vmatprep.subr.mxu0 0.0
    %1557 = vmatpush1.msra.mxu0 0.0
    %1558 = vmatprep.subr.mxu0 0.0
    %1559 = vmatpush1.msra.mxu0 0.0
    %1560 = vmatprep.subr.mxu0 0.0
    %1561 = vmatpush1.msra.mxu0 0.0
    %1562 = vmatprep.subr.mxu0 0.0
    %1563 = vmatpush1.msra.mxu0 0.0
    %1564 = vmatprep.subr.mxu0 0.0
    %1565 = vmatpush1.msra.mxu0 0.0
    %1566 = vmatprep.subr.mxu0 0.0
    %1567 = vmatpush1.msra.mxu0 0.0
    %1568 = vmatprep.subr.mxu0 0.0
    %1569 = vmatpush1.msra.mxu0 0.0
    %1570 = vmatprep.subr.mxu0 0.0
    %1571 = vmatpush1.msra.mxu0 0.0
    %1572 = vmatprep.subr.mxu0 0.0
    %1573 = vmatpush1.msra.mxu0 0.0
    %1574 = vmatprep.subr.mxu0 0.0
    %1575 = vmatpush1.msra.mxu0 0.0
    %1576 = vmatprep.mubr.f32.mxu0 0.0
    %1577 = vmatmul.mubr.f32.gmra.mrb[0].mxu0 %v1504
    %v1578 = vpop.f32.mrb[0].mxu0
    %v1579 = vadd.f32 0.0, %v1578
    %v1580 = vpop.f32.mrb[0].mxu0
    %v1581 = vadd.f32 0.0, %v1580
    %1582 = vdwg.mxu0
    %1583 = vmatprep.subr.mxu0 %v382
    %1584 = vmatpush1.msra.mxu0 %v381
    %1585 = vmatprep.subr.mxu0 %v386
    %1586 = vmatpush1.msra.mxu0 %v385
    %1587 = vmatprep.subr.mxu0 %v390
    %1588 = vmatpush1.msra.mxu0 %v389
    %1589 = vmatprep.subr.mxu0 %v394
    %1590 = vmatpush1.msra.mxu0 %v393
    %1591 = vmatprep.subr.mxu0 %v398
    %1592 = vmatpush1.msra.mxu0 %v397
    %1593 = vmatprep.subr.mxu0 %v402
    %1594 = vmatpush1.msra.mxu0 %v401
    %1595 = vmatprep.subr.mxu0 %v406
    %1596 = vmatpush1.msra.mxu0 %v405
    %1597 = vmatprep.subr.mxu0 %v410
    %1598 = vmatpush1.msra.mxu0 %v409
    %1599 = vmatprep.subr.mxu0 %v414
    %1600 = vmatpush1.msra.mxu0 %v413
    %1601 = vmatprep.subr.mxu0 %v418
    %1602 = vmatpush1.msra.mxu0 %v417
    %1603 = vmatprep.subr.mxu0 %v422
    %1604 = vmatpush1.msra.mxu0 %v421
    %1605 = vmatprep.subr.mxu0 %v426
    %1606 = vmatpush1.msra.mxu0 %v425
    %1607 = vmatprep.subr.mxu0 %v430
    %1608 = vmatpush1.msra.mxu0 %v429
    %1609 = vmatprep.subr.mxu0 %v434
    %1610 = vmatpush1.msra.mxu0 %v433
    %1611 = vmatprep.subr.mxu0 %v438
    %1612 = vmatpush1.msra.mxu0 %v437
    %1613 = vmatprep.subr.mxu0 %v442
    %1614 = vmatpush1.msra.mxu0 %v441
    %1615 = vmatprep.subr.mxu0 0.0
    %1616 = vmatpush1.msra.mxu0 0.0
    %1617 = vmatprep.subr.mxu0 0.0
    %1618 = vmatpush1.msra.mxu0 0.0
    %1619 = vmatprep.subr.mxu0 0.0
    %1620 = vmatpush1.msra.mxu0 0.0
    %1621 = vmatprep.subr.mxu0 0.0
    %1622 = vmatpush1.msra.mxu0 0.0
    %1623 = vmatprep.subr.mxu0 0.0
    %1624 = vmatpush1.msra.mxu0 0.0
    %1625 = vmatprep.subr.mxu0 0.0
    %1626 = vmatpush1.msra.mxu0 0.0
    %1627 = vmatprep.subr.mxu0 0.0
    %1628 = vmatpush1.msra.mxu0 0.0
    %1629 = vmatprep.subr.mxu0 0.0
    %1630 = vmatpush1.msra.mxu0 0.0
    %1631 = vmatprep.subr.mxu0 0.0
    %1632 = vmatpush1.msra.mxu0 0.0
    %1633 = vmatprep.subr.mxu0 0.0
    %1634 = vmatpush1.msra.mxu0 0.0
    %1635 = vmatprep.subr.mxu0 0.0
    %1636 = vmatpush1.msra.mxu0 0.0
    %1637 = vmatprep.subr.mxu0 0.0
    %1638 = vmatpush1.msra.mxu0 0.0
    %1639 = vmatprep.subr.mxu0 0.0
    %1640 = vmatpush1.msra.mxu0 0.0
    %1641 = vmatprep.subr.mxu0 0.0
    %1642 = vmatpush1.msra.mxu0 0.0
    %1643 = vmatprep.subr.mxu0 0.0
    %1644 = vmatpush1.msra.mxu0 0.0
    %1645 = vmatprep.subr.mxu0 0.0
    %1646 = vmatpush1.msra.mxu0 0.0
    %1647 = vmatprep.mubr.f32.mxu0 0.0
    %1648 = vmatmul.mubr.f32.gmra.mrb[0].mxu0 %v1504
    %v1649 = vpop.f32.mrb[0].mxu0
    %v1650 = vadd.f32 0.0, %v1649
    %v1651 = vpop.f32.mrb[0].mxu0
    %v1652 = vadd.f32 0.0, %v1651
    %1653 = vdwg.mxu0
    %v1654 = vadd.f32 %v1508, %v1579
    %v1655 = vadd.f32 %v1509, %v1581
    %v1656 = vadd.f32 %v1510, %v1650
    %v1657 = vadd.f32 %v1511, %v1652
    %v1658 = vxor.u32 %v1654, 2147483648
    %v1659 = vmul.f32 %v1658, 1.442695
    %v1660 = vpow.pop %v1659
    %v1661 = vadd.f32 %v1660, 1.0
    %v1662 = vrcp.pop %v1661
    %v1663 = vmul.f32 1.0, %v1662
    %v1664 = vxor.u32 %v1655, 2147483648
    %v1665 = vmul.f32 %v1664, 1.442695
    %v1666 = vpow.pop %v1665
    %v1667 = vadd.f32 %v1666, 1.0
    %v1668 = vrcp.pop %v1667
    %v1669 = vmul.f32 1.0, %v1668
    %v1670 = vtanh.pop %v1656
    %v1671 = vxor.u32 %v1657, 2147483648
    %v1672 = vmul.f32 %v1671, 1.442695
    %v1673 = vpow.pop %v1672
    %v1674 = vadd.f32 %v1673, 1.0
    %v1675 = vrcp.pop %v1674
    %v1676 = vmul.f32 1.0, %v1675
    %v1677 = vmul.f32 %v1669, %v1502
    %v1678 = vmul.f32 %v1663, %v1670
    %v1679 = vadd.f32 %v1677, %v1678
    %v1680 = vtanh.pop %v1679
    %v1681 = vmul.f32 %v1676, %v1680
    %s1682 = smul.u32 7, 4
    %s1683 = smul.addr %s1682, 8
    %s1684 = scalar_lea.vmem [#allocation2], %s1683
    %v1685 = vld [vmem:[%s1684] sm:$0xff]
    %v1686 = vld [vmem:[%s1684 + $0x8] sm:$0xff]
    %v1687 = vld [vmem:[%s1684 + $0x10] sm:$0xff]
    %v1688 = vld [vmem:[%s1684 + $0x18] sm:$0xff]
    %1689 = vmatprep.subr.mxu0 %v380
    %1690 = vmatpush1.msra.mxu0 %v379
    %1691 = vmatprep.subr.mxu0 %v384
    %1692 = vmatpush1.msra.mxu0 %v383
    %1693 = vmatprep.subr.mxu0 %v388
    %1694 = vmatpush1.msra.mxu0 %v387
    %1695 = vmatprep.subr.mxu0 %v392
    %1696 = vmatpush1.msra.mxu0 %v391
    %1697 = vmatprep.subr.mxu0 %v396
    %1698 = vmatpush1.msra.mxu0 %v395
    %1699 = vmatprep.subr.mxu0 %v400
    %1700 = vmatpush1.msra.mxu0 %v399
    %1701 = vmatprep.subr.mxu0 %v404
    %1702 = vmatpush1.msra.mxu0 %v403
    %1703 = vmatprep.subr.mxu0 %v408
    %1704 = vmatpush1.msra.mxu0 %v407
    %1705 = vmatprep.subr.mxu0 %v412
    %1706 = vmatpush1.msra.mxu0 %v411
    %1707 = vmatprep.subr.mxu0 %v416
    %1708 = vmatpush1.msra.mxu0 %v415
    %1709 = vmatprep.subr.mxu0 %v420
    %1710 = vmatpush1.msra.mxu0 %v419
    %1711 = vmatprep.subr.mxu0 %v424
    %1712 = vmatpush1.msra.mxu0 %v423
    %1713 = vmatprep.subr.mxu0 %v428
    %1714 = vmatpush1.msra.mxu0 %v427
    %1715 = vmatprep.subr.mxu0 %v432
    %1716 = vmatpush1.msra.mxu0 %v431
    %1717 = vmatprep.subr.mxu0 %v436
    %1718 = vmatpush1.msra.mxu0 %v435
    %1719 = vmatprep.subr.mxu0 %v440
    %1720 = vmatpush1.msra.mxu0 %v439
    %1721 = vmatprep.subr.mxu0 0.0
    %1722 = vmatpush1.msra.mxu0 0.0
    %1723 = vmatprep.subr.mxu0 0.0
    %1724 = vmatpush1.msra.mxu0 0.0
    %1725 = vmatprep.subr.mxu0 0.0
    %1726 = vmatpush1.msra.mxu0 0.0
    %1727 = vmatprep.subr.mxu0 0.0
    %1728 = vmatpush1.msra.mxu0 0.0
    %1729 = vmatprep.subr.mxu0 0.0
    %1730 = vmatpush1.msra.mxu0 0.0
    %1731 = vmatprep.subr.mxu0 0.0
    %1732 = vmatpush1.msra.mxu0 0.0
    %1733 = vmatprep.subr.mxu0 0.0
    %1734 = vmatpush1.msra.mxu0 0.0
    %1735 = vmatprep.subr.mxu0 0.0
    %1736 = vmatpush1.msra.mxu0 0.0
    %1737 = vmatprep.subr.mxu0 0.0
    %1738 = vmatpush1.msra.mxu0 0.0
    %1739 = vmatprep.subr.mxu0 0.0
    %1740 = vmatpush1.msra.mxu0 0.0
    %1741 = vmatprep.subr.mxu0 0.0
    %1742 = vmatpush1.msra.mxu0 0.0
    %1743 = vmatprep.subr.mxu0 0.0
    %1744 = vmatpush1.msra.mxu0 0.0
    %1745 = vmatprep.subr.mxu0 0.0
    %1746 = vmatpush1.msra.mxu0 0.0
    %1747 = vmatprep.subr.mxu0 0.0
    %1748 = vmatpush1.msra.mxu0 0.0
    %1749 = vmatprep.subr.mxu0 0.0
    %1750 = vmatpush1.msra.mxu0 0.0
    %1751 = vmatprep.subr.mxu0 0.0
    %1752 = vmatpush1.msra.mxu0 0.0
    %1753 = vmatprep.mubr.f32.mxu0 0.0
    %1754 = vmatmul.mubr.f32.gmra.mrb[0].mxu0 %v1681
    %v1755 = vpop.f32.mrb[0].mxu0
    %v1756 = vadd.f32 0.0, %v1755
    %v1757 = vpop.f32.mrb[0].mxu0
    %v1758 = vadd.f32 0.0, %v1757
    %1759 = vdwg.mxu0
    %1760 = vmatprep.subr.mxu0 %v382
    %1761 = vmatpush1.msra.mxu0 %v381
    %1762 = vmatprep.subr.mxu0 %v386
    %1763 = vmatpush1.msra.mxu0 %v385
    %1764 = vmatprep.subr.mxu0 %v390
    %1765 = vmatpush1.msra.mxu0 %v389
    %1766 = vmatprep.subr.mxu0 %v394
    %1767 = vmatpush1.msra.mxu0 %v393
    %1768 = vmatprep.subr.mxu0 %v398
    %1769 = vmatpush1.msra.mxu0 %v397
    %1770 = vmatprep.subr.mxu0 %v402
    %1771 = vmatpush1.msra.mxu0 %v401
    %1772 = vmatprep.subr.mxu0 %v406
    %1773 = vmatpush1.msra.mxu0 %v405
    %1774 = vmatprep.subr.mxu0 %v410
    %1775 = vmatpush1.msra.mxu0 %v409
    %1776 = vmatprep.subr.mxu0 %v414
    %1777 = vmatpush1.msra.mxu0 %v413
    %1778 = vmatprep.subr.mxu0 %v418
    %1779 = vmatpush1.msra.mxu0 %v417
    %1780 = vmatprep.subr.mxu0 %v422
    %1781 = vmatpush1.msra.mxu0 %v421
    %1782 = vmatprep.subr.mxu0 %v426
    %1783 = vmatpush1.msra.mxu0 %v425
    %1784 = vmatprep.subr.mxu0 %v430
    %1785 = vmatpush1.msra.mxu0 %v429
    %1786 = vmatprep.subr.mxu0 %v434
    %1787 = vmatpush1.msra.mxu0 %v433
    %1788 = vmatprep.subr.mxu0 %v438
    %1789 = vmatpush1.msra.mxu0 %v437
    %1790 = vmatprep.subr.mxu0 %v442
    %1791 = vmatpush1.msra.mxu0 %v441
    %1792 = vmatprep.subr.mxu0 0.0
    %1793 = vmatpush1.msra.mxu0 0.0
    %1794 = vmatprep.subr.mxu0 0.0
    %1795 = vmatpush1.msra.mxu0 0.0
    %1796 = vmatprep.subr.mxu0 0.0
    %1797 = vmatpush1.msra.mxu0 0.0
    %1798 = vmatprep.subr.mxu0 0.0
    %1799 = vmatpush1.msra.mxu0 0.0
    %1800 = vmatprep.subr.mxu0 0.0
    %1801 = vmatpush1.msra.mxu0 0.0
    %1802 = vmatprep.subr.mxu0 0.0
    %1803 = vmatpush1.msra.mxu0 0.0
    %1804 = vmatprep.subr.mxu0 0.0
    %1805 = vmatpush1.msra.mxu0 0.0
    %1806 = vmatprep.subr.mxu0 0.0
    %1807 = vmatpush1.msra.mxu0 0.0
    %1808 = vmatprep.subr.mxu0 0.0
    %1809 = vmatpush1.msra.mxu0 0.0
    %1810 = vmatprep.subr.mxu0 0.0
    %1811 = vmatpush1.msra.mxu0 0.0
    %1812 = vmatprep.subr.mxu0 0.0
    %1813 = vmatpush1.msra.mxu0 0.0
    %1814 = vmatprep.subr.mxu0 0.0
    %1815 = vmatpush1.msra.mxu0 0.0
    %1816 = vmatprep.subr.mxu0 0.0
    %1817 = vmatpush1.msra.mxu0 0.0
    %1818 = vmatprep.subr.mxu0 0.0
    %1819 = vmatpush1.msra.mxu0 0.0
    %1820 = vmatprep.subr.mxu0 0.0
    %1821 = vmatpush1.msra.mxu0 0.0
    %1822 = vmatprep.subr.mxu0 0.0
    %1823 = vmatpush1.msra.mxu0 0.0
    %1824 = vmatprep.mubr.f32.mxu0 0.0
    %1825 = vmatmul.mubr.f32.gmra.mrb[0].mxu0 %v1681
    %v1826 = vpop.f32.mrb[0].mxu0
    %v1827 = vadd.f32 0.0, %v1826
    %v1828 = vpop.f32.mrb[0].mxu0
    %v1829 = vadd.f32 0.0, %v1828
    %1830 = vdwg.mxu0
    %v1831 = vadd.f32 %v1685, %v1756
    %v1832 = vadd.f32 %v1686, %v1758
    %v1833 = vadd.f32 %v1687, %v1827
    %v1834 = vadd.f32 %v1688, %v1829
    %v1835 = vxor.u32 %v1831, 2147483648
    %v1836 = vmul.f32 %v1835, 1.442695
    %v1837 = vpow.pop %v1836
    %v1838 = vadd.f32 %v1837, 1.0
    %v1839 = vrcp.pop %v1838
    %v1840 = vmul.f32 1.0, %v1839
    %v1841 = vxor.u32 %v1832, 2147483648
    %v1842 = vmul.f32 %v1841, 1.442695
    %v1843 = vpow.pop %v1842
    %v1844 = vadd.f32 %v1843, 1.0
    %v1845 = vrcp.pop %v1844
    %v1846 = vmul.f32 1.0, %v1845
    %v1847 = vtanh.pop %v1833
    %v1848 = vxor.u32 %v1834, 2147483648
    %v1849 = vmul.f32 %v1848, 1.442695
    %v1850 = vpow.pop %v1849
    %v1851 = vadd.f32 %v1850, 1.0
    %v1852 = vrcp.pop %v1851
    %v1853 = vmul.f32 1.0, %v1852
    %v1854 = vmul.f32 %v1846, %v1679
    %v1855 = vmul.f32 %v1840, %v1847
    %v1856 = vadd.f32 %v1854, %v1855
    %v1857 = vtanh.pop %v1856
    %v1858 = vmul.f32 %v1853, %v1857
    %v1859 = vld [vmem:[#allocation5] sm:$0xff]
    %v1860 = vld [vmem:[#allocation5 + $0x8] sm:$0xff]
    %v1861 = vld [vmem:[#allocation5 + $0x10] sm:$0xff]
    %v1862 = vld [vmem:[#allocation5 + $0x18] sm:$0xff]
    %v1863 = vld [vmem:[#allocation5 + $0x20] sm:$0xff]
    %v1864 = vld [vmem:[#allocation5 + $0x28] sm:$0xff]
    %v1865 = vld [vmem:[#allocation5 + $0x30] sm:$0xff]
    %v1866 = vld [vmem:[#allocation5 + $0x38] sm:$0xff]
    %v1867 = vld [vmem:[#allocation5 + $0x40] sm:$0xff]
    %v1868 = vld [vmem:[#allocation5 + $0x48] sm:$0xff]
    %v1869 = vld [vmem:[#allocation5 + $0x50] sm:$0xff]
    %v1870 = vld [vmem:[#allocation5 + $0x58] sm:$0xff]
    %v1871 = vld [vmem:[#allocation5 + $0x60] sm:$0xff]
    %v1872 = vld [vmem:[#allocation5 + $0x68] sm:$0xff]
    %v1873 = vld [vmem:[#allocation5 + $0x70] sm:$0xff]
    %v1874 = vld [vmem:[#allocation5 + $0x78] sm:$0xff]
    %v1875 = vld [vmem:[%s5] sm:$0x1]
    %v1877 = vlaneseq
    %v1878 = vshrl.u32 %v1877, 7
    %v1879 = vsub.s32 0, %v1878
    %v1880 = vrot.slane %v1875, %v1879
    %1882 = vmatprep.subr.mxu0 0.0
    %1883 = vmatpush1.msra.mxu0 %v1859
    %1884 = vmatprep.subr.mxu0 0.0
    %1885 = vmatpush1.msra.mxu0 %v1860
    %1886 = vmatprep.subr.mxu0 0.0
    %1887 = vmatpush1.msra.mxu0 %v1861
    %1888 = vmatprep.subr.mxu0 0.0
    %1889 = vmatpush1.msra.mxu0 %v1862
    %1890 = vmatprep.subr.mxu0 0.0
    %1891 = vmatpush1.msra.mxu0 %v1863
    %1892 = vmatprep.subr.mxu0 0.0
    %1893 = vmatpush1.msra.mxu0 %v1864
    %1894 = vmatprep.subr.mxu0 0.0
    %1895 = vmatpush1.msra.mxu0 %v1865
    %1896 = vmatprep.subr.mxu0 0.0
    %1897 = vmatpush1.msra.mxu0 %v1866
    %1898 = vmatprep.subr.mxu0 0.0
    %1899 = vmatpush1.msra.mxu0 %v1867
    %1900 = vmatprep.subr.mxu0 0.0
    %1901 = vmatpush1.msra.mxu0 %v1868
    %1902 = vmatprep.subr.mxu0 0.0
    %1903 = vmatpush1.msra.mxu0 %v1869
    %1904 = vmatprep.subr.mxu0 0.0
    %1905 = vmatpush1.msra.mxu0 %v1870
    %1906 = vmatprep.subr.mxu0 0.0
    %1907 = vmatpush1.msra.mxu0 %v1871
    %1908 = vmatprep.subr.mxu0 0.0
    %1909 = vmatpush1.msra.mxu0 %v1872
    %1910 = vmatprep.subr.mxu0 0.0
    %1911 = vmatpush1.msra.mxu0 %v1873
    %1912 = vmatprep.subr.mxu0 0.0
    %1913 = vmatpush1.msra.mxu0 %v1874
    %1914 = vmatprep.subr.mxu0 0.0
    %1915 = vmatpush1.msra.mxu0 0.0
    %1916 = vmatprep.subr.mxu0 0.0
    %1917 = vmatpush1.msra.mxu0 0.0
    %1918 = vmatprep.subr.mxu0 0.0
    %1919 = vmatpush1.msra.mxu0 0.0
    %1920 = vmatprep.subr.mxu0 0.0
    %1921 = vmatpush1.msra.mxu0 0.0
    %1922 = vmatprep.subr.mxu0 0.0
    %1923 = vmatpush1.msra.mxu0 0.0
    %1924 = vmatprep.subr.mxu0 0.0
    %1925 = vmatpush1.msra.mxu0 0.0
    %1926 = vmatprep.subr.mxu0 0.0
    %1927 = vmatpush1.msra.mxu0 0.0
    %1928 = vmatprep.subr.mxu0 0.0
    %1929 = vmatpush1.msra.mxu0 0.0
    %1930 = vmatprep.subr.mxu0 0.0
    %1931 = vmatpush1.msra.mxu0 0.0
    %1932 = vmatprep.subr.mxu0 0.0
    %1933 = vmatpush1.msra.mxu0 0.0
    %1934 = vmatprep.subr.mxu0 0.0
    %1935 = vmatpush1.msra.mxu0 0.0
    %1936 = vmatprep.subr.mxu0 0.0
    %1937 = vmatpush1.msra.mxu0 0.0
    %1938 = vmatprep.subr.mxu0 0.0
    %1939 = vmatpush1.msra.mxu0 0.0
    %1940 = vmatprep.subr.mxu0 0.0
    %1941 = vmatpush1.msra.mxu0 0.0
    %1942 = vmatprep.subr.mxu0 0.0
    %1943 = vmatpush1.msra.mxu0 0.0
    %1944 = vmatprep.subr.mxu0 0.0
    %1945 = vmatpush1.msra.mxu0 0.0
    %1946 = vmatprep.mubr.f32.mxu0 0.0
    %1947 = vmatmul.mubr.f32.gmra.mrb[0].mxu0 %v1858
    %v1948 = vpop.f32.mrb[0].mxu0
    %v1949 = vadd.f32 %v1880, %v1948
    %v1950 = vpop.f32.mrb[0].mxu0
    %1951 = vdwg.mxu0
    %1952 = vst [vmem:[%s6] sm:$0xff] %v1949
    // Predicated region
    $region34: #{forward.1} parent=1 // pred_check
      _
    $region35: #{forward.1} parent=1 // pred_check_branch
      %1954 = sbr.rel (0) target = $region37
    $region36: #{forward.1} parent=1 // pred_region
      _
    $region37: #{forward.1} parent=1 // pred_fallthru
      _
    // Predicated region
    $region38: #{forward.1} parent=1 // pred_check
      _
    $region39: #{forward.1} parent=1 // pred_check_branch
      %1956 = sbr.rel (0) target = $region41
    $region40: #{forward.1} parent=1 // pred_region
      _
    $region41: #{forward.1} parent=1 // pred_fallthru
      _
    %1957 = vsyncpa [#allocation4], 1
    %1958 = vsyncpa [#allocation6], 1

</llo_original>
